<compile_context>
chip_gen: v6e
topology: v6e:2x2x1
jax: 0.10.0
libtpu: 0.0.40
codegen_flags: <defaults>
</compile_context>

<pallas_src>
import functools

import jax
import jax.numpy as jnp
from jax import lax
from jax.experimental import pallas as pl
from jax.experimental.pallas import tpu as pltpu

CP = 128            # lane-padded channel width for every intermediate
EPS = 1e-5          # BatchNorm eps (PyTorch default)

_CPARAMS = pltpu.CompilerParams(vmem_limit_bytes=32 * 1024 * 1024)

# ConvTranspose2d(k=4, s=2, p=1) stride-phase decomposition: output parity
# (py, px) touches a 2x2 subset of taps on the undilated input.
# Entries are (kernel_index, padded_row_offset).
_T_TAPS = (((1, 1), (3, 0)), ((2, 1), (0, 2)))


# Layout: pixel (y, x) of image n lives at flat row n*Lpad + (Wp+2) + y*Wp + x,
# Wp = W + 2, Lpad = (H+3)*Wp (pad: top 1 row, bottom 2 rows, left 2 cols).
# All pad rows/cols and pad channels are exactly zero.  Tap shifts below are
# relative to the matmul output row j (pixel (y, x) <-> j = y*Wp + x).
def _conv3_taps(Wp):
    return tuple((ky * 3 + kx, ky * Wp + kx + 1)
                 for ky in range(3) for kx in range(3))


def _convT_taps(Wp):
    phases = []
    for py in range(2):
        for px in range(2):
            phases.append(tuple((kh * 4 + kw, oh * Wp + ow + 1)
                                for (kh, oh) in _T_TAPS[py]
                                for (kw, ow) in _T_TAPS[px]))
    return tuple(phases)


# ----------------------------------------------------------------------------
# Pallas kernels (cached builders; identical-shape layers reuse the program)
# ----------------------------------------------------------------------------
@functools.lru_cache(maxsize=None)
def _conv3_bn_relu_call(N, H, W, with_res):
    """Fused Conv2d(3x3,s1,p1) -> BN(train) -> ReLU [-> +residual -> ReLU].

    Reads and writes the bf16 padded-flat layout.  Taps are folded into K and
    the batch into M, so the whole layer is a single MXU matmul plus one
    masked stats reduction and a fused epilogue."""
    Wp = W + 2
    Lpad = (H + 3) * Wp
    Lo = H * Wp
    Mf = (N - 1) * Lpad + Lo          # batch folded into the matmul M dim
    off = Wp + 2                       # flat offset of pixel (0, 0)
    taps = _conv3_taps(Wp)
    inv_cnt = 1.0 / float(N * H * W)

    def kernel(x_ref, w_ref, g_ref, b_ref, *rest):
        res_ref = rest[0] if with_res else None
        o_ref = rest[-1]
        # taps folded into K: one (Mf, 9*CP) x (9*CP, CP) matmul per layer
        win = jnp.concatenate([x_ref[s:s + Mf, :] for _, s in taps], axis=1)
        acc = jnp.dot(win, w_ref[...], preferred_element_type=jnp.float32)
        # training-mode BN stats: one masked reduction over the whole layer
        r = lax.broadcasted_iota(jnp.int32, (Mf, 1), 0) % Lpad
        valid = jnp.logical_and(r < Lo, r % Wp < W).astype(jnp.float32)
        av = acc * valid
        mean = jnp.sum(av, axis=0, keepdims=True) * inv_cnt
        var = jnp.maximum(
            jnp.sum(av * acc, axis=0, keepdims=True) * inv_cnt - mean * mean,
            0.0)
        scale = g_ref[...] * lax.rsqrt(var + EPS)
        shift = b_ref[...] - mean * scale
        a = jnp.maximum(acc * scale + shift, 0.0)
        if with_res:
            a = jnp.maximum(
                a + res_ref[off:off + Mf, :].astype(jnp.float32), 0.0)
        a = a * valid                  # zero the pad rows/cols of the layout
        # write straight into the next layer's padded-flat layout (bf16)
        o_ref[...] = jnp.zeros((N * Lpad, CP), jnp.bfloat16)
        o_ref[off:off + Mf, :] = a.astype(jnp.bfloat16)

    return pl.pallas_call(
        kernel,
        out_shape=jax.ShapeDtypeStruct((N * Lpad, CP), jnp.bfloat16),
        compiler_params=_CPARAMS)


@functools.lru_cache(maxsize=None)
def _convT_bn_relu_call(N, H, W):
    """Fused ConvTranspose2d(4,4,s2,p1) -> BN(train) -> ReLU.

    One matmul per stride phase (taps folded into K, batch into M); output is
    phase-major bf16 (the wrapper does one cheap interleave+re-pad)."""
    Wp = W + 2
    Lpad = (H + 3) * Wp
    Lo = H * Wp
    Mf = (N - 1) * Lpad + Lo
    phases = _convT_taps(Wp)
    inv_cnt = 1.0 / float(N * 4 * H * W)

    def kernel(x_ref, w_ref, g_ref, b_ref, o_ref):
        r = lax.broadcasted_iota(jnp.int32, (Mf, 1), 0) % Lpad
        valid = jnp.logical_and(r < Lo, r % Wp < W).astype(jnp.float32)
        accs = []
        s = jnp.zeros((1, CP), jnp.float32)
        q = jnp.zeros((1, CP), jnp.float32)
        for ph in range(4):
            win = jnp.concatenate(
                [x_ref[sh:sh + Mf, :] for _, sh in phases[ph]], axis=1)
            acc = jnp.dot(win, w_ref[ph], preferred_element_type=jnp.float32)
            av = acc * valid
            s = s + jnp.sum(av, axis=0, keepdims=True)
            q = q + jnp.sum(av * acc, axis=0, keepdims=True)
            accs.append(acc)
        mean = s * inv_cnt
        var = jnp.maximum(q * inv_cnt - mean * mean, 0.0)
        scale = g_ref[...] * lax.rsqrt(var + EPS)
        shift = b_ref[...] - mean * scale
        for ph in range(4):
            out = jnp.maximum(accs[ph] * scale + shift, 0.0).astype(jnp.bfloat16)
            for n in range(N):
                o_ref[ph, n, :, :] = out[n * Lpad:n * Lpad + Lo, :]

    return pl.pallas_call(
        kernel,
        out_shape=jax.ShapeDtypeStruct((4, N, Lo, CP), jnp.bfloat16),
        compiler_params=_CPARAMS)


@functools.lru_cache(maxsize=None)
def _convT_bias_tanh_call(N, H, W):
    """Final ConvTranspose2d(4,4,s2,p1) with bias + tanh fused (no BN)."""
    Wp = W + 2
    Lpad = (H + 3) * Wp
    Lo = H * Wp
    Mf = (N - 1) * Lpad + Lo
    phases = _convT_taps(Wp)

    def kernel(x_ref, w_ref, b_ref, o_ref):
        for ph in range(4):
            win = jnp.concatenate(
                [x_ref[sh:sh + Mf, :] for _, sh in phases[ph]], axis=1)
            acc = jnp.dot(win, w_ref[ph], preferred_element_type=jnp.float32)
            y = jnp.tanh(acc + b_ref[...])
            for n in range(N):
                o_ref[ph, n, :, :] = y[n * Lpad:n * Lpad + Lo, :]

    return pl.pallas_call(
        kernel,
        out_shape=jax.ShapeDtypeStruct((4, N, Lo, CP), jnp.float32),
        compiler_params=_CPARAMS)


# ----------------------------------------------------------------------------
# layout / weight-packing helpers (run once at init or at stage boundaries)
# ----------------------------------------------------------------------------
def _to_padded_flat(x_nhwc):
    """NHWC f32 -> bf16 channel-padded, spatially padded, flattened layout."""
    N, H, W, C = x_nhwc.shape
    xp = jnp.pad(x_nhwc, ((0, 0), (1, 2), (2, 0), (0, CP - C)))
    return xp.reshape(N * (H + 3) * (W + 2), CP).astype(jnp.bfloat16)


def _pack_conv3_w(w):
    cout, cin = w.shape[0], w.shape[1]
    wt = jnp.transpose(w, (2, 3, 1, 0)).reshape(9, cin, cout)
    wt = jnp.pad(wt, ((0, 0), (0, CP - cin), (0, CP - cout)))
    return wt.reshape(9 * CP, CP).astype(jnp.bfloat16)


def _pack_convT_w(w):
    cin, cout = w.shape[0], w.shape[1]
    wt = jnp.transpose(w, (2, 3, 0, 1)).reshape(16, cin, cout)
    wt = jnp.pad(wt, ((0, 0), (0, CP - cin), (0, CP - cout)))
    # tap order per phase must match the kernel's concat order (Wp-independent)
    stacks = [jnp.concatenate([wt[t] for t, _ in ph], axis=0)
              for ph in _convT_taps(1)]
    return jnp.stack(stacks, axis=0).astype(jnp.bfloat16)


def _pad_vec(v):
    return jnp.pad(v, (0, CP - v.shape[0])).reshape(1, CP).astype(jnp.float32)


# ----------------------------------------------------------------------------
# layer wrappers
# ----------------------------------------------------------------------------
def _conv3_bn_relu(xf, p, N, H, W, residual=None):
    call = _conv3_bn_relu_call(N, H, W, residual is not None)
    if residual is None:
        return call(xf, p["wp"], p["gp"], p["bp"])
    return call(xf, p["wp"], p["gp"], p["bp"], residual)


def _up_conv_bn_relu(xf, p, N, H, W):
    Wp = W + 2
    y = _convT_bn_relu_call(N, H, W)(xf, p["wp"], p["gp"], p["bp"])
    y = y.reshape(2, 2, N, H, Wp, CP)[..., :W, :]
    y = jnp.transpose(y, (2, 3, 0, 4, 1, 5)).reshape(N, 2 * H, 2 * W, CP)
    # re-pack into the next layer's padded-flat layout (bf16, zero pads)
    Ho, Wo = 2 * H, 2 * W
    yp = jnp.pad(y, ((0, 0), (1, 2), (2, 0), (0, 0)))
    return yp.reshape(N * (Ho + 3) * (Wo + 2), CP)


def _final_convT_tanh(xf, p, N, H, W):
    Wp = W + 2
    y = _convT_bias_tanh_call(N, H, W)(xf, p["wp"], p["bp"])
    y = y.reshape(2, 2, N, H, Wp, CP)[..., :W, :]
    y = jnp.transpose(y, (2, 3, 0, 4, 1, 5)).reshape(N, 2 * H, 2 * W, CP)
    return y[..., :p["cout"]]


def res_block_fwd(xf, p, N, H, W):
    h = _conv3_bn_relu(xf, p["c1"], N, H, W)
    # second conv's epilogue fuses ReLU(out + x)   (extra == identity)
    return _conv3_bn_relu(h, p["c2"], N, H, W, residual=xf)


def resnet_fwd(xf, p, N, H, W):
    out = _conv3_bn_relu(xf, p["conv"], N, H, W)
    for blk in p["blks"]:
        out = res_block_fwd(out, blk, N, H, W)
    # Conv_x depends only on xf; running it last lets its epilogue fuse the
    # final ReLU(conv_x(x) + out) (the add commutes).
    out = _conv3_bn_relu(xf, p["conv_x"], N, H, W, residual=out)
    return _conv3_bn_relu(out, p["out"], N, H, W)


def generator_forward(x_nchw, params):
    N, _, H, W = x_nchw.shape
    xf = _to_padded_flat(jnp.transpose(x_nchw, (0, 2, 3, 1)))
    for st in params["stages"]:
        xf = _up_conv_bn_relu(xf, st["up"], N, H, W)
        H, W = 2 * H, 2 * W
        xf = resnet_fwd(xf, st["res"], N, H, W)
    y = _final_convT_tanh(xf, params["final"], N, H, W)
    return jnp.transpose(y, (0, 3, 1, 2))


# ----------------------------------------------------------------------------
# parameter init (deterministic, synthetic)
# ----------------------------------------------------------------------------
CHANS = (16, 16, 8, 8)  # TODO(synk): stand-ins for the real (1024, 512, 256, 64)


def _conv_bn_params(key, cin, cout):
    k1, k2, k3 = jax.random.split(key, 3)
    # NOTE: conv biases feeding training-mode BN are omitted (BN with batch
    # statistics cancels any per-channel pre-bias exactly).
    w = 0.05 * jax.random.normal(k1, (cout, cin, 3, 3), jnp.float32)
    gamma = 1.0 + 0.1 * jax.random.normal(k2, (cout,), jnp.float32)
    beta = 0.1 * jax.random.normal(k3, (cout,), jnp.float32)
    return {"w": w, "gamma": gamma, "beta": beta,
            "wp": _pack_conv3_w(w), "gp": _pad_vec(gamma), "bp": _pad_vec(beta)}


def _up_bn_params(key, cin, cout):
    k1, k2, k3 = jax.random.split(key, 3)
    w = 0.05 * jax.random.normal(k1, (cin, cout, 4, 4), jnp.float32)
    gamma = 1.0 + 0.1 * jax.random.normal(k2, (cout,), jnp.float32)
    beta = 0.1 * jax.random.normal(k3, (cout,), jnp.float32)
    return {"w": w, "gamma": gamma, "beta": beta,
            "wp": _pack_convT_w(w), "gp": _pad_vec(gamma), "bp": _pad_vec(beta)}


def init_generator(key, num_input, num_output, chans=CHANS):
    keys = iter(jax.random.split(key, 256))
    stages = []
    cin = num_input
    for c in chans:
        up = _up_bn_params(next(keys), cin, c)
        res = {"conv": _conv_bn_params(next(keys), c, c),
               "conv_x": _conv_bn_params(next(keys), c, c),
               "blks": [{"c1": _conv_bn_params(next(keys), c, c),
                         "c2": _conv_bn_params(next(keys), c, c)}
                        for _ in range(4)],
               "out": _conv_bn_params(next(keys), c, c)}
        stages.append({"up": up, "res": res})
        cin = c
    k1, k2 = jax.random.split(next(keys))
    w = 0.05 * jax.random.normal(k1, (cin, num_output, 4, 4), jnp.float32)
    b = 0.01 * jax.random.normal(k2, (num_output,), jnp.float32)
    final = {"w": w, "b": b, "wp": _pack_convT_w(w), "bp": _pad_vec(b),
             "cout": num_output}
    return {"stages": stages, "final": final}


# ----------------------------------------------------------------------------
# pure-JAX reference (lax.conv_general_dilated), bf16 rounding points matched
# ----------------------------------------------------------------------------
def _rd(x):
    return x.astype(jnp.bfloat16).astype(jnp.float32)


def _ref_conv3(x, w):
    return lax.conv_general_dilated(
        x.astype(jnp.bfloat16),
        jnp.transpose(w, (2, 3, 1, 0)).astype(jnp.bfloat16),
        window_strides=(1, 1), padding=((1, 1), (1, 1)),
        dimension_numbers=("NHWC", "HWIO", "NHWC"),
        preferred_element_type=jnp.float32)


def _ref_convT(x, w):
    wf = jnp.transpose(w[:, :, ::-1, ::-1], (2, 3, 0, 1))
    return lax.conv_general_dilated(
        x.astype(jnp.bfloat16), wf.astype(jnp.bfloat16),
        window_strides=(1, 1), padding=((2, 2), (2, 2)),
        lhs_dilation=(2, 2),
        dimension_numbers=("NHWC", "HWIO", "NHWC"),
        preferred_element_type=jnp.float32)


def _ref_bn_relu(y, gamma, beta):
    mean = jnp.mean(y, axis=(0, 1, 2))
    var = jnp.mean(jnp.square(y - mean), axis=(0, 1, 2))   # biased variance
    return jnp.maximum((y - mean) * (gamma * lax.rsqrt(var + EPS)) + beta, 0.0)


def _ref_cbr(x, p, residual=None):
    y = _ref_bn_relu(_ref_conv3(x, p["w"]), p["gamma"], p["beta"])
    if residual is not None:
        y = jnp.maximum(y + residual, 0.0)
    return _rd(y)


def reference_forward(x_nchw, params):
    x = _rd(jnp.transpose(x_nchw, (0, 2, 3, 1)))
    for st in params["stages"]:
        up = st["up"]
        x = _rd(_ref_bn_relu(_ref_convT(x, up["w"]), up["gamma"], up["beta"]))
        rp = st["res"]
        out = _ref_cbr(x, rp["conv"])
        for blk in rp["blks"]:
            h = _ref_cbr(out, blk["c1"])
            out = _ref_cbr(h, blk["c2"], residual=out)
        out = _ref_cbr(x, rp["conv_x"], residual=out)
        x = _ref_cbr(out, rp["out"])
    y = jnp.tanh(_ref_convT(x, params["final"]["w"]) + params["final"]["b"])
    return jnp.transpose(y, (0, 3, 1, 2))


# ----------------------------------------------------------------------------
if __name__ == "__main__":
    key = jax.random.PRNGKey(0)
    kx, kp = jax.random.split(key)

    num_input, num_output = 8, 3
    # DCGAN latent (N, nz, 1, 1); five stride-2 transposed convs -> 32x32 out
    x = jax.random.normal(kx, (2, num_input, 1, 1), jnp.float32)
    params = init_generator(kp, num_input, num_output)

    y = jax.block_until_ready(generator_forward(x, params))
    assert y.shape == (2, num_output, 32, 32), y.shape
    assert bool(jnp.all(jnp.isfinite(y)))

    # numerical check against the pure-JAX reference
    y_ref = jax.block_until_ready(reference_forward(x, params))
    err = float(jnp.max(jnp.abs(y - y_ref)))
    assert err < 2e-2, f"max abs err vs reference: {err}"

    print("KERNEL_OK")
</pallas_src>

<mosaic_0001>
module attributes {stable_mosaic.version = 11 : i64} {
  func.func @kernel(%arg0: memref<24x128xbf16, #tpu.memory_space<vmem>>, %arg1: memref<4x512x128xbf16, #tpu.memory_space<vmem>>, %arg2: memref<1x128xf32, #tpu.memory_space<vmem>>, %arg3: memref<1x128xf32, #tpu.memory_space<vmem>>, %arg4: memref<4x2x3x128xbf16, #tpu.memory_space<vmem>>) attributes {dimension_semantics = [], scalar_prefetch = 0 : i64, scratch_operands = 0 : i64, tpu.core_type = #tpu.core_type<tc>} {
    %0 = tpu.iota {dimensions = array<i32: 0>} : vector<15x1xi32>
    %c12_i32 = arith.constant 12 : i32
    %c0_i32 = arith.constant 0 : i32
    %1 = arith.cmpi eq, %c12_i32, %c0_i32 : i32
    %c1_i32 = arith.constant 1 : i32
    %2 = arith.select %1, %c1_i32, %c12_i32 : i32
    %3 = vector.broadcast %2 : i32 to vector<15x1xi32>
    %4 = arith.remsi %0, %3 : vector<15x1xi32>
    %c0_i32_0 = arith.constant 0 : i32
    %5 = vector.broadcast %c0_i32_0 : i32 to vector<15x1xi32>
    %6 = arith.cmpi ne, %4, %5 : vector<15x1xi32>
    %c0_i32_1 = arith.constant 0 : i32
    %7 = vector.broadcast %c0_i32_1 : i32 to vector<15x1xi32>
    %8 = arith.cmpi slt, %4, %7 : vector<15x1xi32>
    %c0_i32_2 = arith.constant 0 : i32
    %9 = arith.cmpi slt, %2, %c0_i32_2 : i32
    %10 = vector.broadcast %9 : i1 to vector<15x1xi1>
    %11 = vector.broadcast %10 : vector<15x1xi1> to vector<15x1xi1>
    %12 = arith.xori %8, %11 : vector<15x1xi1>
    %13 = arith.andi %12, %6 : vector<15x1xi1>
    %14 = vector.broadcast %2 : i32 to vector<15x1xi32>
    %15 = arith.addi %4, %14 : vector<15x1xi32>
    %16 = arith.select %13, %15, %4 : vector<15x1xi1>, vector<15x1xi32>
    %c3_i32 = arith.constant 3 : i32
    %17 = vector.broadcast %c3_i32 : i32 to vector<15x1xi32>
    %18 = arith.cmpi slt, %16, %17 : vector<15x1xi32>
    %c3_i32_3 = arith.constant 3 : i32
    %c0_i32_4 = arith.constant 0 : i32
    %19 = arith.cmpi eq, %c3_i32_3, %c0_i32_4 : i32
    %c1_i32_5 = arith.constant 1 : i32
    %20 = arith.select %19, %c1_i32_5, %c3_i32_3 : i32
    %21 = vector.broadcast %20 : i32 to vector<15x1xi32>
    %22 = arith.remsi %16, %21 : vector<15x1xi32>
    %c0_i32_6 = arith.constant 0 : i32
    %23 = vector.broadcast %c0_i32_6 : i32 to vector<15x1xi32>
    %24 = arith.cmpi ne, %22, %23 : vector<15x1xi32>
    %c0_i32_7 = arith.constant 0 : i32
    %25 = vector.broadcast %c0_i32_7 : i32 to vector<15x1xi32>
    %26 = arith.cmpi slt, %22, %25 : vector<15x1xi32>
    %c0_i32_8 = arith.constant 0 : i32
    %27 = arith.cmpi slt, %20, %c0_i32_8 : i32
    %28 = vector.broadcast %27 : i1 to vector<15x1xi1>
    %29 = vector.broadcast %28 : vector<15x1xi1> to vector<15x1xi1>
    %30 = arith.xori %26, %29 : vector<15x1xi1>
    %31 = arith.andi %30, %24 : vector<15x1xi1>
    %32 = vector.broadcast %20 : i32 to vector<15x1xi32>
    %33 = arith.addi %22, %32 : vector<15x1xi32>
    %34 = arith.select %31, %33, %22 : vector<15x1xi1>, vector<15x1xi32>
    %c1_i32_9 = arith.constant 1 : i32
    %35 = vector.broadcast %c1_i32_9 : i32 to vector<15x1xi32>
    %36 = arith.cmpi slt, %34, %35 : vector<15x1xi32>
    %37 = arith.andi %18, %36 : vector<15x1xi1>
    %38 = arith.extui %37 : vector<15x1xi1> to vector<15x1xi32>
    %39 = arith.sitofp %38 : vector<15x1xi32> to vector<15x1xf32>
    %cst = arith.constant 0.000000e+00 : f32
    %40 = vector.broadcast %cst : f32 to vector<1x128xf32>
    %cst_10 = arith.constant 0.000000e+00 : f32
    %41 = vector.broadcast %cst_10 : f32 to vector<1x128xf32>
    %c5 = arith.constant 5 : index
    %c0 = arith.constant 0 : index
    %42 = vector.load %arg0[%c5, %c0] : memref<24x128xbf16, #tpu.memory_space<vmem>>, vector<15x128xbf16>
    %c4 = arith.constant 4 : index
    %c0_11 = arith.constant 0 : index
    %43 = vector.load %arg0[%c4, %c0_11] : memref<24x128xbf16, #tpu.memory_space<vmem>>, vector<15x128xbf16>
    %c2 = arith.constant 2 : index
    %c0_12 = arith.constant 0 : index
    %44 = vector.load %arg0[%c2, %c0_12] : memref<24x128xbf16, #tpu.memory_space<vmem>>, vector<15x128xbf16>
    %c1 = arith.constant 1 : index
    %c0_13 = arith.constant 0 : index
    %45 = vector.load %arg0[%c1, %c0_13] : memref<24x128xbf16, #tpu.memory_space<vmem>>, vector<15x128xbf16>
    %46 = tpu.concatenate %42, %43, %44, %45 in 1 : vector<15x128xbf16>, vector<15x128xbf16>, vector<15x128xbf16>, vector<15x128xbf16> -> vector<15x512xbf16>
    %c0_14 = arith.constant 0 : index
    %c0_15 = arith.constant 0 : index
    %c0_16 = arith.constant 0 : index
    %47 = vector.load %arg1[%c0_14, %c0_15, %c0_16] : memref<4x512x128xbf16, #tpu.memory_space<vmem>>, vector<1x512x128xbf16>
    %48 = vector.shape_cast %47 : vector<1x512x128xbf16> to vector<512x128xbf16>
    %cst_17 = arith.constant dense<0.000000e+00> : vector<15x128xf32>
    %49 = tpu.matmul %46, %48, %cst_17 {dimension_numbers = #tpu.dot_dimension_numbers<[1], [0], [0], [1], [0, 0, 1, 1], [], []>} : vector<15x512xbf16>, vector<512x128xbf16>, vector<15x128xf32> -> vector<15x128xf32>
    %50 = vector.broadcast %39 : vector<15x1xf32> to vector<15x128xf32>
    %51 = arith.mulf %49, %50 : vector<15x128xf32>
    %cst_18 = arith.constant dense<0.000000e+00> : vector<128xf32>
    %52 = vector.multi_reduction <add>, %51, %cst_18 [0] : vector<15x128xf32> to vector<128xf32>
    %53 = vector.shape_cast %52 : vector<128xf32> to vector<1x128xf32>
    %54 = arith.addf %40, %53 : vector<1x128xf32>
    %55 = arith.mulf %51, %49 : vector<15x128xf32>
    %cst_19 = arith.constant dense<0.000000e+00> : vector<128xf32>
    %56 = vector.multi_reduction <add>, %55, %cst_19 [0] : vector<15x128xf32> to vector<128xf32>
    %57 = vector.shape_cast %56 : vector<128xf32> to vector<1x128xf32>
    %58 = arith.addf %41, %57 : vector<1x128xf32>
    %c5_20 = arith.constant 5 : index
    %c0_21 = arith.constant 0 : index
    %59 = vector.load %arg0[%c5_20, %c0_21] : memref<24x128xbf16, #tpu.memory_space<vmem>>, vector<15x128xbf16>
    %c6 = arith.constant 6 : index
    %c0_22 = arith.constant 0 : index
    %60 = vector.load %arg0[%c6, %c0_22] : memref<24x128xbf16, #tpu.memory_space<vmem>>, vector<15x128xbf16>
    %c2_23 = arith.constant 2 : index
    %c0_24 = arith.constant 0 : index
    %61 = vector.load %arg0[%c2_23, %c0_24] : memref<24x128xbf16, #tpu.memory_space<vmem>>, vector<15x128xbf16>
    %c3 = arith.constant 3 : index
    %c0_25 = arith.constant 0 : index
    %62 = vector.load %arg0[%c3, %c0_25] : memref<24x128xbf16, #tpu.memory_space<vmem>>, vector<15x128xbf16>
    %63 = tpu.concatenate %59, %60, %61, %62 in 1 : vector<15x128xbf16>, vector<15x128xbf16>, vector<15x128xbf16>, vector<15x128xbf16> -> vector<15x512xbf16>
    %c1_26 = arith.constant 1 : index
    %c0_27 = arith.constant 0 : index
    %c0_28 = arith.constant 0 : index
    %64 = vector.load %arg1[%c1_26, %c0_27, %c0_28] : memref<4x512x128xbf16, #tpu.memory_space<vmem>>, vector<1x512x128xbf16>
    %65 = vector.shape_cast %64 : vector<1x512x128xbf16> to vector<512x128xbf16>
    %cst_29 = arith.constant dense<0.000000e+00> : vector<15x128xf32>
    %66 = tpu.matmul %63, %65, %cst_29 {dimension_numbers = #tpu.dot_dimension_numbers<[1], [0], [0], [1], [0, 0, 1, 1], [], []>} : vector<15x512xbf16>, vector<512x128xbf16>, vector<15x128xf32> -> vector<15x128xf32>
    %67 = vector.broadcast %39 : vector<15x1xf32> to vector<15x128xf32>
    %68 = arith.mulf %66, %67 : vector<15x128xf32>
    %cst_30 = arith.constant dense<0.000000e+00> : vector<128xf32>
    %69 = vector.multi_reduction <add>, %68, %cst_30 [0] : vector<15x128xf32> to vector<128xf32>
    %70 = vector.shape_cast %69 : vector<128xf32> to vector<1x128xf32>
    %71 = arith.addf %54, %70 : vector<1x128xf32>
    %72 = arith.mulf %68, %66 : vector<15x128xf32>
    %cst_31 = arith.constant dense<0.000000e+00> : vector<128xf32>
    %73 = vector.multi_reduction <add>, %72, %cst_31 [0] : vector<15x128xf32> to vector<128xf32>
    %74 = vector.shape_cast %73 : vector<128xf32> to vector<1x128xf32>
    %75 = arith.addf %58, %74 : vector<1x128xf32>
    %c5_32 = arith.constant 5 : index
    %c0_33 = arith.constant 0 : index
    %76 = vector.load %arg0[%c5_32, %c0_33] : memref<24x128xbf16, #tpu.memory_space<vmem>>, vector<15x128xbf16>
    %c4_34 = arith.constant 4 : index
    %c0_35 = arith.constant 0 : index
    %77 = vector.load %arg0[%c4_34, %c0_35] : memref<24x128xbf16, #tpu.memory_space<vmem>>, vector<15x128xbf16>
    %c8 = arith.constant 8 : index
    %c0_36 = arith.constant 0 : index
    %78 = vector.load %arg0[%c8, %c0_36] : memref<24x128xbf16, #tpu.memory_space<vmem>>, vector<15x128xbf16>
    %c7 = arith.constant 7 : index
    %c0_37 = arith.constant 0 : index
    %79 = vector.load %arg0[%c7, %c0_37] : memref<24x128xbf16, #tpu.memory_space<vmem>>, vector<15x128xbf16>
    %80 = tpu.concatenate %76, %77, %78, %79 in 1 : vector<15x128xbf16>, vector<15x128xbf16>, vector<15x128xbf16>, vector<15x128xbf16> -> vector<15x512xbf16>
    %c2_38 = arith.constant 2 : index
    %c0_39 = arith.constant 0 : index
    %c0_40 = arith.constant 0 : index
    %81 = vector.load %arg1[%c2_38, %c0_39, %c0_40] : memref<4x512x128xbf16, #tpu.memory_space<vmem>>, vector<1x512x128xbf16>
    %82 = vector.shape_cast %81 : vector<1x512x128xbf16> to vector<512x128xbf16>
    %cst_41 = arith.constant dense<0.000000e+00> : vector<15x128xf32>
    %83 = tpu.matmul %80, %82, %cst_41 {dimension_numbers = #tpu.dot_dimension_numbers<[1], [0], [0], [1], [0, 0, 1, 1], [], []>} : vector<15x512xbf16>, vector<512x128xbf16>, vector<15x128xf32> -> vector<15x128xf32>
    %84 = vector.broadcast %39 : vector<15x1xf32> to vector<15x128xf32>
    %85 = arith.mulf %83, %84 : vector<15x128xf32>
    %cst_42 = arith.constant dense<0.000000e+00> : vector<128xf32>
    %86 = vector.multi_reduction <add>, %85, %cst_42 [0] : vector<15x128xf32> to vector<128xf32>
    %87 = vector.shape_cast %86 : vector<128xf32> to vector<1x128xf32>
    %88 = arith.addf %71, %87 : vector<1x128xf32>
    %89 = arith.mulf %85, %83 : vector<15x128xf32>
    %cst_43 = arith.constant dense<0.000000e+00> : vector<128xf32>
    %90 = vector.multi_reduction <add>, %89, %cst_43 [0] : vector<15x128xf32> to vector<128xf32>
    %91 = vector.shape_cast %90 : vector<128xf32> to vector<1x128xf32>
    %92 = arith.addf %75, %91 : vector<1x128xf32>
    %c5_44 = arith.constant 5 : index
    %c0_45 = arith.constant 0 : index
    %93 = vector.load %arg0[%c5_44, %c0_45] : memref<24x128xbf16, #tpu.memory_space<vmem>>, vector<15x128xbf16>
    %c6_46 = arith.constant 6 : index
    %c0_47 = arith.constant 0 : index
    %94 = vector.load %arg0[%c6_46, %c0_47] : memref<24x128xbf16, #tpu.memory_space<vmem>>, vector<15x128xbf16>
    %c8_48 = arith.constant 8 : index
    %c0_49 = arith.constant 0 : index
    %95 = vector.load %arg0[%c8_48, %c0_49] : memref<24x128xbf16, #tpu.memory_space<vmem>>, vector<15x128xbf16>
    %c9 = arith.constant 9 : index
    %c0_50 = arith.constant 0 : index
    %96 = vector.load %arg0[%c9, %c0_50] : memref<24x128xbf16, #tpu.memory_space<vmem>>, vector<15x128xbf16>
    %97 = tpu.concatenate %93, %94, %95, %96 in 1 : vector<15x128xbf16>, vector<15x128xbf16>, vector<15x128xbf16>, vector<15x128xbf16> -> vector<15x512xbf16>
    %c3_51 = arith.constant 3 : index
    %c0_52 = arith.constant 0 : index
    %c0_53 = arith.constant 0 : index
    %98 = vector.load %arg1[%c3_51, %c0_52, %c0_53] : memref<4x512x128xbf16, #tpu.memory_space<vmem>>, vector<1x512x128xbf16>
    %99 = vector.shape_cast %98 : vector<1x512x128xbf16> to vector<512x128xbf16>
    %cst_54 = arith.constant dense<0.000000e+00> : vector<15x128xf32>
    %100 = tpu.matmul %97, %99, %cst_54 {dimension_numbers = #tpu.dot_dimension_numbers<[1], [0], [0], [1], [0, 0, 1, 1], [], []>} : vector<15x512xbf16>, vector<512x128xbf16>, vector<15x128xf32> -> vector<15x128xf32>
    %101 = vector.broadcast %39 : vector<15x1xf32> to vector<15x128xf32>
    %102 = arith.mulf %100, %101 : vector<15x128xf32>
    %cst_55 = arith.constant dense<0.000000e+00> : vector<128xf32>
    %103 = vector.multi_reduction <add>, %102, %cst_55 [0] : vector<15x128xf32> to vector<128xf32>
    %104 = vector.shape_cast %103 : vector<128xf32> to vector<1x128xf32>
    %105 = arith.addf %88, %104 : vector<1x128xf32>
    %106 = arith.mulf %102, %100 : vector<15x128xf32>
    %cst_56 = arith.constant dense<0.000000e+00> : vector<128xf32>
    %107 = vector.multi_reduction <add>, %106, %cst_56 [0] : vector<15x128xf32> to vector<128xf32>
    %108 = vector.shape_cast %107 : vector<128xf32> to vector<1x128xf32>
    %109 = arith.addf %92, %108 : vector<1x128xf32>
    %cst_57 = arith.constant 1.250000e-01 : f32
    %110 = vector.broadcast %cst_57 : f32 to vector<1x128xf32>
    %111 = arith.mulf %105, %110 : vector<1x128xf32>
    %cst_58 = arith.constant 1.250000e-01 : f32
    %112 = vector.broadcast %cst_58 : f32 to vector<1x128xf32>
    %113 = arith.mulf %109, %112 : vector<1x128xf32>
    %114 = arith.mulf %111, %111 : vector<1x128xf32>
    %115 = arith.subf %113, %114 : vector<1x128xf32>
    %cst_59 = arith.constant 0.000000e+00 : f32
    %116 = vector.broadcast %cst_59 : f32 to vector<1x128xf32>
    %117 = arith.maximumf %115, %116 : vector<1x128xf32>
    %c0_60 = arith.constant 0 : index
    %c0_61 = arith.constant 0 : index
    %118 = vector.load %arg2[%c0_60, %c0_61] : memref<1x128xf32, #tpu.memory_space<vmem>>, vector<1x128xf32>
    %cst_62 = arith.constant 9.99999974E-6 : f32
    %119 = vector.broadcast %cst_62 : f32 to vector<1x128xf32>
    %120 = arith.addf %117, %119 : vector<1x128xf32>
    %121 = math.rsqrt %120 : vector<1x128xf32>
    %122 = arith.mulf %118, %121 : vector<1x128xf32>
    %c0_63 = arith.constant 0 : index
    %c0_64 = arith.constant 0 : index
    %123 = vector.load %arg3[%c0_63, %c0_64] : memref<1x128xf32, #tpu.memory_space<vmem>>, vector<1x128xf32>
    %124 = arith.mulf %111, %122 : vector<1x128xf32>
    %125 = arith.subf %123, %124 : vector<1x128xf32>
    %126 = vector.broadcast %122 : vector<1x128xf32> to vector<15x128xf32>
    %127 = arith.mulf %49, %126 : vector<15x128xf32>
    %128 = vector.broadcast %125 : vector<1x128xf32> to vector<15x128xf32>
    %129 = arith.addf %127, %128 : vector<15x128xf32>
    %cst_65 = arith.constant 0.000000e+00 : f32
    %130 = vector.broadcast %cst_65 : f32 to vector<15x128xf32>
    %131 = arith.maximumf %129, %130 : vector<15x128xf32>
    %132 = arith.truncf %131 : vector<15x128xf32> to vector<15x128xbf16>
    %133 = vector.extract_strided_slice %132 {offsets = [0, 0], sizes = [3, 128], strides = [1, 1]} : vector<15x128xbf16> to vector<3x128xbf16>
    %c0_66 = arith.constant 0 : index
    %c0_67 = arith.constant 0 : index
    %c0_68 = arith.constant 0 : index
    %c0_69 = arith.constant 0 : index
    %134 = vector.load %arg4[%c0_66, %c0_67, %c0_68, %c0_69] : memref<4x2x3x128xbf16, #tpu.memory_space<vmem>>, vector<1x1x3x128xbf16>
    %135 = vector.shape_cast %134 : vector<1x1x3x128xbf16> to vector<3x128xbf16>
    %136 = vector.shape_cast %133 : vector<3x128xbf16> to vector<1x1x3x128xbf16>
    tpu.vector_store %arg4[%c0_66, %c0_67, %c0_68, %c0_69], %136 {strides = array<i32>} : memref<4x2x3x128xbf16, #tpu.memory_space<vmem>>, vector<1x1x3x128xbf16>,
    %137 = vector.extract_strided_slice %132 {offsets = [12, 0], sizes = [3, 128], strides = [1, 1]} : vector<15x128xbf16> to vector<3x128xbf16>
    %c0_70 = arith.constant 0 : index
    %c1_71 = arith.constant 1 : index
    %c0_72 = arith.constant 0 : index
    %c0_73 = arith.constant 0 : index
    %138 = vector.load %arg4[%c0_70, %c1_71, %c0_72, %c0_73] : memref<4x2x3x128xbf16, #tpu.memory_space<vmem>>, vector<1x1x3x128xbf16>
    %139 = vector.shape_cast %138 : vector<1x1x3x128xbf16> to vector<3x128xbf16>
    %140 = vector.shape_cast %137 : vector<3x128xbf16> to vector<1x1x3x128xbf16>
    tpu.vector_store %arg4[%c0_70, %c1_71, %c0_72, %c0_73], %140 {strides = array<i32>} : memref<4x2x3x128xbf16, #tpu.memory_space<vmem>>, vector<1x1x3x128xbf16>,
    %141 = vector.broadcast %122 : vector<1x128xf32> to vector<15x128xf32>
    %142 = arith.mulf %66, %141 : vector<15x128xf32>
    %143 = vector.broadcast %125 : vector<1x128xf32> to vector<15x128xf32>
    %144 = arith.addf %142, %143 : vector<15x128xf32>
    %cst_74 = arith.constant 0.000000e+00 : f32
    %145 = vector.broadcast %cst_74 : f32 to vector<15x128xf32>
    %146 = arith.maximumf %144, %145 : vector<15x128xf32>
    %147 = arith.truncf %146 : vector<15x128xf32> to vector<15x128xbf16>
    %148 = vector.extract_strided_slice %147 {offsets = [0, 0], sizes = [3, 128], strides = [1, 1]} : vector<15x128xbf16> to vector<3x128xbf16>
    %c1_75 = arith.constant 1 : index
    %c0_76 = arith.constant 0 : index
    %c0_77 = arith.constant 0 : index
    %c0_78 = arith.constant 0 : index
    %149 = vector.load %arg4[%c1_75, %c0_76, %c0_77, %c0_78] : memref<4x2x3x128xbf16, #tpu.memory_space<vmem>>, vector<1x1x3x128xbf16>
    %150 = vector.shape_cast %149 : vector<1x1x3x128xbf16> to vector<3x128xbf16>
    %151 = vector.shape_cast %148 : vector<3x128xbf16> to vector<1x1x3x128xbf16>
    tpu.vector_store %arg4[%c1_75, %c0_76, %c0_77, %c0_78], %151 {strides = array<i32>} : memref<4x2x3x128xbf16, #tpu.memory_space<vmem>>, vector<1x1x3x128xbf16>,
    %152 = vector.extract_strided_slice %147 {offsets = [12, 0], sizes = [3, 128], strides = [1, 1]} : vector<15x128xbf16> to vector<3x128xbf16>
    %c1_79 = arith.constant 1 : index
    %c1_80 = arith.constant 1 : index
    %c0_81 = arith.constant 0 : index
    %c0_82 = arith.constant 0 : index
    %153 = vector.load %arg4[%c1_79, %c1_80, %c0_81, %c0_82] : memref<4x2x3x128xbf16, #tpu.memory_space<vmem>>, vector<1x1x3x128xbf16>
    %154 = vector.shape_cast %153 : vector<1x1x3x128xbf16> to vector<3x128xbf16>
    %155 = vector.shape_cast %152 : vector<3x128xbf16> to vector<1x1x3x128xbf16>
    tpu.vector_store %arg4[%c1_79, %c1_80, %c0_81, %c0_82], %155 {strides = array<i32>} : memref<4x2x3x128xbf16, #tpu.memory_space<vmem>>, vector<1x1x3x128xbf16>,
    %156 = vector.broadcast %122 : vector<1x128xf32> to vector<15x128xf32>
    %157 = arith.mulf %83, %156 : vector<15x128xf32>
    %158 = vector.broadcast %125 : vector<1x128xf32> to vector<15x128xf32>
    %159 = arith.addf %157, %158 : vector<15x128xf32>
    %cst_83 = arith.constant 0.000000e+00 : f32
    %160 = vector.broadcast %cst_83 : f32 to vector<15x128xf32>
    %161 = arith.maximumf %159, %160 : vector<15x128xf32>
    %162 = arith.truncf %161 : vector<15x128xf32> to vector<15x128xbf16>
    %163 = vector.extract_strided_slice %162 {offsets = [0, 0], sizes = [3, 128], strides = [1, 1]} : vector<15x128xbf16> to vector<3x128xbf16>
    %c2_84 = arith.constant 2 : index
    %c0_85 = arith.constant 0 : index
    %c0_86 = arith.constant 0 : index
    %c0_87 = arith.constant 0 : index
    %164 = vector.load %arg4[%c2_84, %c0_85, %c0_86, %c0_87] : memref<4x2x3x128xbf16, #tpu.memory_space<vmem>>, vector<1x1x3x128xbf16>
    %165 = vector.shape_cast %164 : vector<1x1x3x128xbf16> to vector<3x128xbf16>
    %166 = vector.shape_cast %163 : vector<3x128xbf16> to vector<1x1x3x128xbf16>
    tpu.vector_store %arg4[%c2_84, %c0_85, %c0_86, %c0_87], %166 {strides = array<i32>} : memref<4x2x3x128xbf16, #tpu.memory_space<vmem>>, vector<1x1x3x128xbf16>,
    %167 = vector.extract_strided_slice %162 {offsets = [12, 0], sizes = [3, 128], strides = [1, 1]} : vector<15x128xbf16> to vector<3x128xbf16>
    %c2_88 = arith.constant 2 : index
    %c1_89 = arith.constant 1 : index
    %c0_90 = arith.constant 0 : index
    %c0_91 = arith.constant 0 : index
    %168 = vector.load %arg4[%c2_88, %c1_89, %c0_90, %c0_91] : memref<4x2x3x128xbf16, #tpu.memory_space<vmem>>, vector<1x1x3x128xbf16>
    %169 = vector.shape_cast %168 : vector<1x1x3x128xbf16> to vector<3x128xbf16>
    %170 = vector.shape_cast %167 : vector<3x128xbf16> to vector<1x1x3x128xbf16>
    tpu.vector_store %arg4[%c2_88, %c1_89, %c0_90, %c0_91], %170 {strides = array<i32>} : memref<4x2x3x128xbf16, #tpu.memory_space<vmem>>, vector<1x1x3x128xbf16>,
    %171 = vector.broadcast %122 : vector<1x128xf32> to vector<15x128xf32>
    %172 = arith.mulf %100, %171 : vector<15x128xf32>
    %173 = vector.broadcast %125 : vector<1x128xf32> to vector<15x128xf32>
    %174 = arith.addf %172, %173 : vector<15x128xf32>
    %cst_92 = arith.constant 0.000000e+00 : f32
    %175 = vector.broadcast %cst_92 : f32 to vector<15x128xf32>
    %176 = arith.maximumf %174, %175 : vector<15x128xf32>
    %177 = arith.truncf %176 : vector<15x128xf32> to vector<15x128xbf16>
    %178 = vector.extract_strided_slice %177 {offsets = [0, 0], sizes = [3, 128], strides = [1, 1]} : vector<15x128xbf16> to vector<3x128xbf16>
    %c3_93 = arith.constant 3 : index
    %c0_94 = arith.constant 0 : index
    %c0_95 = arith.constant 0 : index
    %c0_96 = arith.constant 0 : index
    %179 = vector.load %arg4[%c3_93, %c0_94, %c0_95, %c0_96] : memref<4x2x3x128xbf16, #tpu.memory_space<vmem>>, vector<1x1x3x128xbf16>
    %180 = vector.shape_cast %179 : vector<1x1x3x128xbf16> to vector<3x128xbf16>
    %181 = vector.shape_cast %178 : vector<3x128xbf16> to vector<1x1x3x128xbf16>
    tpu.vector_store %arg4[%c3_93, %c0_94, %c0_95, %c0_96], %181 {strides = array<i32>} : memref<4x2x3x128xbf16, #tpu.memory_space<vmem>>, vector<1x1x3x128xbf16>,
    %182 = vector.extract_strided_slice %177 {offsets = [12, 0], sizes = [3, 128], strides = [1, 1]} : vector<15x128xbf16> to vector<3x128xbf16>
    %c3_97 = arith.constant 3 : index
    %c1_98 = arith.constant 1 : index
    %c0_99 = arith.constant 0 : index
    %c0_100 = arith.constant 0 : index
    %183 = vector.load %arg4[%c3_97, %c1_98, %c0_99, %c0_100] : memref<4x2x3x128xbf16, #tpu.memory_space<vmem>>, vector<1x1x3x128xbf16>
    %184 = vector.shape_cast %183 : vector<1x1x3x128xbf16> to vector<3x128xbf16>
    %185 = vector.shape_cast %182 : vector<3x128xbf16> to vector<1x1x3x128xbf16>
    tpu.vector_store %arg4[%c3_97, %c1_98, %c0_99, %c0_100], %185 {strides = array<i32>} : memref<4x2x3x128xbf16, #tpu.memory_space<vmem>>, vector<1x1x3x128xbf16>,
    return
  }
}

</mosaic_0001>

<llo_original>
// kernel: tpu_custom_call.1
$region0: #{tpu_custom_call.1}
  #allocation0 [shape = 'u32[]', space=smem, size = 0x4, offset = 0x4, fixed_abs, tag = 'smem constant byte address 0x4 - core index']
  #allocation1 [shape = 'u32[144,128]{1,0:T(1,128)}', space=vmem, size = 0x12000, scoped, tag = 'internal scratch']
  %s0 = inlined_call_operand.hbm [shape: bf16[24,128], index: 0, kind: input, shape index: {}]
  %s1 = inlined_call_operand.hbm [shape: bf16[4,512,128], index: 1, kind: input, shape index: {}]
  %s2 = inlined_call_operand.vmem [shape: f32[1,128], index: 2, kind: input, shape index: {}]
  %s3 = inlined_call_operand.vmem [shape: f32[1,128], index: 3, kind: input, shape index: {}]
  %s4 = inlined_call_operand.vmem [shape: bf16[4,2,3,128], index: 4, kind: output, shape index: {}]
  %s5 = sld [smem:[#allocation0]]
  $region34: #{tpu_custom_call.1} parent=0
    _
  %s7 = ssub.s32 1, %s5
  %s8 = scalar_select 0, %s7, %s5
  $region1: #{tpu_custom_call.1} parent=0
    #allocation2 [shape = 'u8[6144]{0}', space=vmem, size = 0x1800, scoped, tag = 'input window, operand 0, single buffered']
    #allocation3 [shape = 's32[1]{0}', space=sflag, size = 0x4, scoped, tag = 'scoped memory for tpu_custom_call.1']
    #allocation4 [shape = 'u8[524288]{0}', space=vmem, size = 0x80000, scoped, tag = 'input window, operand 1, single buffered']
    #allocation5 [shape = 's32[1]{0}', space=sflag, size = 0x4, scoped, tag = 'scoped memory for tpu_custom_call.1']
    %9 = vsyncpa [#allocation3], 0
    %10 = vsyncpa [#allocation5], 0
    // Predicated region
    $region2: #{tpu_custom_call.1} parent=1 // pred_check
      _
    $region3: #{tpu_custom_call.1} parent=1 // pred_check_branch
      %12 = sbr.rel (0) target = $region5
    $region4: #{tpu_custom_call.1} parent=1 // pred_region
      %s14 = ssub.s32 192, 192
      %15 = vsyncadd [#allocation3], %s14
      %s16 = sshll.u32 [#allocation2], 4
      %s17 = int_to_ptr.vmem [resolvable:$true] %s16
      %22 = dma.hbm_to_vmem [thread:$0]  %s0, 192, %s17, [#allocation3], 64, 64, 4
    $region5: #{tpu_custom_call.1} parent=1 // pred_fallthru
      _
    // Predicated region
    $region6: #{tpu_custom_call.1} parent=1 // pred_check
      _
    $region7: #{tpu_custom_call.1} parent=1 // pred_check_branch
      %24 = sbr.rel (0) target = $region9
    $region8: #{tpu_custom_call.1} parent=1 // pred_region
      %s26 = ssub.s32 16384, 16384
      %27 = vsyncadd [#allocation5], %s26
      %s28 = sshll.u32 [#allocation4], 4
      %s29 = int_to_ptr.vmem [resolvable:$true] %s28
      %34 = dma.hbm_to_vmem [thread:$0]  %s1, 16384, %s29, [#allocation5], 64, 64, 4
    $region9: #{tpu_custom_call.1} parent=1 // pred_fallthru
      _
    // Predicated region
    $region10: #{tpu_custom_call.1} parent=1 // pred_check
      _
    $region11: #{tpu_custom_call.1} parent=1 // pred_check_branch
      %36 = sbr.rel (0) target = $region13
    $region12: #{tpu_custom_call.1} parent=1 // pred_region
      _
    $region13: #{tpu_custom_call.1} parent=1 // pred_fallthru
      _
    // Predicated region
    $region14: #{tpu_custom_call.1} parent=1 // pred_check
      _
    $region15: #{tpu_custom_call.1} parent=1 // pred_check_branch
      %38 = sbr.rel (0) target = $region17
    $region16: #{tpu_custom_call.1} parent=1 // pred_region
      _
    $region17: #{tpu_custom_call.1} parent=1 // pred_fallthru
      _
    // Predicated region
    $region18: #{tpu_custom_call.1} parent=1 // pred_check
      _
    $region19: #{tpu_custom_call.1} parent=1 // pred_check_branch
      %40 = sbr.rel (0) target = $region21
    $region20: #{tpu_custom_call.1} parent=1 // pred_region
      %41 = dma.done [#allocation3], 192
    $region21: #{tpu_custom_call.1} parent=1 // pred_fallthru
      _
    // Predicated region
    $region22: #{tpu_custom_call.1} parent=1 // pred_check
      _
    $region23: #{tpu_custom_call.1} parent=1 // pred_check_branch
      %43 = sbr.rel (0) target = $region25
    $region24: #{tpu_custom_call.1} parent=1 // pred_region
      %44 = dma.done [#allocation5], 16384
    $region25: #{tpu_custom_call.1} parent=1 // pred_fallthru
      _
    %v46 = vlaneseq
    %v47 = vshrl.u32 %v46, 7
    %v48 = vadd.s32 %v47, 8
    %vm49 = vcmp.lt.s32.totalorder %v47, 0
    %v50 = vsub.s32 0, %v47
    %v51 = vsel %vm49, %v50, %v47
    %v52 = vmul.u32.u64.compose %v51, 2863311531
    %v53 = vextract.low.u32 %v52
    %v54 = vextract.high.u32 %v52
    %v55 = vshrl.u32 %v54, 3
    %v56 = vmul.u32 %v55, 12
    %v57 = vsub.s32 %v51, %v56
    %v58 = vsub.s32 0, %v57
    %v59 = vsel %vm49, %v58, %v57
    %vm60 = vcmp.lt.s32.totalorder %v48, 0
    %v61 = vsub.s32 0, %v48
    %v62 = vsel %vm60, %v61, %v48
    %v63 = vmul.u32.u64.compose %v62, 2863311531
    %v64 = vextract.low.u32 %v63
    %v65 = vextract.high.u32 %v63
    %v66 = vshrl.u32 %v65, 3
    %v67 = vmul.u32 %v66, 12
    %v68 = vsub.s32 %v62, %v67
    %v69 = vsub.s32 0, %v68
    %v70 = vsel %vm60, %v69, %v68
    %vm71 = vcmp.ne.s32.totalorder %v59, 0
    %vm72 = vcmp.ne.s32.totalorder %v70, 0
    %vm73 = vcmp.lt.s32.totalorder %v59, 0
    %vm74 = vcmp.lt.s32.totalorder %v70, 0
    %vm75 = vmand %vm73, %vm71
    %vm76 = vmand %vm74, %vm72
    %v77 = vadd.s32 %v59, 12
    %v78 = vadd.s32 %v70, 12
    %v79 = vsel %vm75, %v77, %v59
    %v80 = vsel %vm76, %v78, %v70
    %vm81 = vcmp.lt.s32.totalorder %v79, 3
    %vm82 = vcmp.lt.s32.totalorder %v80, 3
    %vm83 = vcmp.lt.s32.totalorder %v79, 0
    %v84 = vsub.s32 0, %v79
    %v85 = vsel %vm83, %v84, %v79
    %v86 = vmul.u32.u64.compose %v85, 2863311531
    %v87 = vextract.low.u32 %v86
    %v88 = vextract.high.u32 %v86
    %v89 = vshrl.u32 %v88, 1
    %v90 = vmul.u32 %v89, 3
    %v91 = vsub.s32 %v85, %v90
    %v92 = vsub.s32 0, %v91
    %v93 = vsel %vm83, %v92, %v91
    %vm94 = vcmp.lt.s32.totalorder %v80, 0
    %v95 = vsub.s32 0, %v80
    %v96 = vsel %vm94, %v95, %v80
    %v97 = vmul.u32.u64.compose %v96, 2863311531
    %v98 = vextract.low.u32 %v97
    %v99 = vextract.high.u32 %v97
    %v100 = vshrl.u32 %v99, 1
    %v101 = vmul.u32 %v100, 3
    %v102 = vsub.s32 %v96, %v101
    %v103 = vsub.s32 0, %v102
    %v104 = vsel %vm94, %v103, %v102
    %vm105 = vcmp.ne.s32.totalorder %v93, 0
    %vm106 = vcmp.ne.s32.totalorder %v104, 0
    %vm107 = vcmp.lt.s32.totalorder %v93, 0
    %vm108 = vcmp.lt.s32.totalorder %v104, 0
    %vm109 = vmand %vm107, %vm105
    %vm110 = vmand %vm108, %vm106
    %v111 = vadd.s32 %v93, 3
    %v112 = vadd.s32 %v104, 3
    %v113 = vsel %vm109, %v111, %v93
    %v114 = vsel %vm110, %v112, %v104
    %vm115 = vcmp.lt.s32.totalorder %v113, 1
    %vm116 = vcmp.lt.s32.totalorder %v114, 1
    %vm117 = vmand %vm81, %vm115
    %vm118 = vmand %vm82, %vm116
    %v119 = vsel %vm117, 1, 0
    %v120 = vsel %vm118, 1, 0
    %v121 = vcvt.s32.f32 %v119
    %v122 = vcvt.s32.f32 %v120
    %v123 = vld [vmem:[#allocation2] sm:$0xc]
    %v124 = vld [vmem:[#allocation2 + $0x4] sm:$0xf]
    %v125 = vld [vmem:[#allocation2 + $0x8] sm:$0x3]
    %v126 = vld [vmem:[#allocation2] sm:$0xe]
    %v127 = vld [vmem:[#allocation2 + $0x8] sm:$0x1]
    %v128 = vld [vmem:[#allocation2] sm:$0xf]
    %v129 = vld [vmem:[#allocation2 + $0x4] sm:$0xf]
    %v133 = vunpack.c.l.b16 %v123
    %v134 = vunpack.c.l.b16 %v124
    %v135 = vunpack.c.l.b16 %v125
    %v136 = vpack.c.b16 %v134, %v133
    %v137 = vpack.c.b16 %v135, %v135
    %vm138 = vsmask.f32 256
    %v140 = vshrl.u32 %v136, 16
    %v142 = vrot.slane %v140, 7
    %v143 = vshll.u32 %v136, 16
    %v145 = vor.u32 %v142, %v143
    %v147 = vshrl.u32 %v137, 16
    %v149 = vrot.slane %v147, 7
    %v150 = vshll.u32 %v137, 16
    %v152 = vor.u32 %v149, %v150
    %v153 = vsel %vm138, %v142, %v152
    %v156 = vunpack.c.l.b16 %v126
    %v157 = vunpack.c.l.b16 %v127
    %v158 = vpack.c.b16 %v134, %v156
    %v159 = vpack.c.b16 %v157, %v157
    %vm160 = vsmask.f32 1280
    %v162 = vshrl.u32 %v158, 16
    %v164 = vrot.slane %v162, 6
    %v165 = vshll.u32 %v158, 16
    %v167 = vrot.slane %v165, 7
    %v168 = vor.u32 %v164, %v167
    %v170 = vshll.u32 %v159, 16
    %v172 = vrot.slane %v170, 7
    %v173 = vsel %vm160, %v168, %v172
    %v176 = vunpack.c.l.b16 %v128
    %v177 = vunpack.c.l.b16 %v129
    %v178 = vpack.c.b16 %v177, %v176
    %v179 = vrot.slane %v178, 6
    %v180 = vld [vmem:[#allocation4] sm:$0xf]
    %v181 = vld [vmem:[#allocation4 + $0x4] sm:$0xf]
    %v182 = vld [vmem:[#allocation4 + $0x8] sm:$0xf]
    %v183 = vld [vmem:[#allocation4 + $0xc] sm:$0xf]
    %v184 = vld [vmem:[#allocation4 + $0x10] sm:$0xf]
    %v185 = vld [vmem:[#allocation4 + $0x14] sm:$0xf]
    %v186 = vld [vmem:[#allocation4 + $0x18] sm:$0xf]
    %v187 = vld [vmem:[#allocation4 + $0x1c] sm:$0xf]
    %v188 = vld [vmem:[#allocation4 + $0x20] sm:$0xf]
    %v189 = vld [vmem:[#allocation4 + $0x24] sm:$0xf]
    %v190 = vld [vmem:[#allocation4 + $0x28] sm:$0xf]
    %v191 = vld [vmem:[#allocation4 + $0x2c] sm:$0xf]
    %v192 = vld [vmem:[#allocation4 + $0x30] sm:$0xf]
    %v193 = vld [vmem:[#allocation4 + $0x34] sm:$0xf]
    %v194 = vld [vmem:[#allocation4 + $0x38] sm:$0xf]
    %v195 = vld [vmem:[#allocation4 + $0x3c] sm:$0xf]
    %v196 = vld [vmem:[#allocation4 + $0x40] sm:$0xf]
    %v197 = vld [vmem:[#allocation4 + $0x44] sm:$0xf]
    %v198 = vld [vmem:[#allocation4 + $0x48] sm:$0xf]
    %v199 = vld [vmem:[#allocation4 + $0x4c] sm:$0xf]
    %v200 = vld [vmem:[#allocation4 + $0x50] sm:$0xf]
    %v201 = vld [vmem:[#allocation4 + $0x54] sm:$0xf]
    %v202 = vld [vmem:[#allocation4 + $0x58] sm:$0xf]
    %v203 = vld [vmem:[#allocation4 + $0x5c] sm:$0xf]
    %v204 = vld [vmem:[#allocation4 + $0x60] sm:$0xf]
    %v205 = vld [vmem:[#allocation4 + $0x64] sm:$0xf]
    %v206 = vld [vmem:[#allocation4 + $0x68] sm:$0xf]
    %v207 = vld [vmem:[#allocation4 + $0x6c] sm:$0xf]
    %v208 = vld [vmem:[#allocation4 + $0x70] sm:$0xf]
    %v209 = vld [vmem:[#allocation4 + $0x74] sm:$0xf]
    %v210 = vld [vmem:[#allocation4 + $0x78] sm:$0xf]
    %v211 = vld [vmem:[#allocation4 + $0x7c] sm:$0xf]
    %v212 = vld [vmem:[#allocation4 + $0x80] sm:$0xf]
    %v213 = vld [vmem:[#allocation4 + $0x84] sm:$0xf]
    %v214 = vld [vmem:[#allocation4 + $0x88] sm:$0xf]
    %v215 = vld [vmem:[#allocation4 + $0x8c] sm:$0xf]
    %v216 = vld [vmem:[#allocation4 + $0x90] sm:$0xf]
    %v217 = vld [vmem:[#allocation4 + $0x94] sm:$0xf]
    %v218 = vld [vmem:[#allocation4 + $0x98] sm:$0xf]
    %v219 = vld [vmem:[#allocation4 + $0x9c] sm:$0xf]
    %v220 = vld [vmem:[#allocation4 + $0xa0] sm:$0xf]
    %v221 = vld [vmem:[#allocation4 + $0xa4] sm:$0xf]
    %v222 = vld [vmem:[#allocation4 + $0xa8] sm:$0xf]
    %v223 = vld [vmem:[#allocation4 + $0xac] sm:$0xf]
    %v224 = vld [vmem:[#allocation4 + $0xb0] sm:$0xf]
    %v225 = vld [vmem:[#allocation4 + $0xb4] sm:$0xf]
    %v226 = vld [vmem:[#allocation4 + $0xb8] sm:$0xf]
    %v227 = vld [vmem:[#allocation4 + $0xbc] sm:$0xf]
    %v228 = vld [vmem:[#allocation4 + $0xc0] sm:$0xf]
    %v229 = vld [vmem:[#allocation4 + $0xc4] sm:$0xf]
    %v230 = vld [vmem:[#allocation4 + $0xc8] sm:$0xf]
    %v231 = vld [vmem:[#allocation4 + $0xcc] sm:$0xf]
    %v232 = vld [vmem:[#allocation4 + $0xd0] sm:$0xf]
    %v233 = vld [vmem:[#allocation4 + $0xd4] sm:$0xf]
    %v234 = vld [vmem:[#allocation4 + $0xd8] sm:$0xf]
    %v235 = vld [vmem:[#allocation4 + $0xdc] sm:$0xf]
    %v236 = vld [vmem:[#allocation4 + $0xe0] sm:$0xf]
    %v237 = vld [vmem:[#allocation4 + $0xe4] sm:$0xf]
    %v238 = vld [vmem:[#allocation4 + $0xe8] sm:$0xf]
    %v239 = vld [vmem:[#allocation4 + $0xec] sm:$0xf]
    %v240 = vld [vmem:[#allocation4 + $0xf0] sm:$0xf]
    %v241 = vld [vmem:[#allocation4 + $0xf4] sm:$0xf]
    %v242 = vld [vmem:[#allocation4 + $0xf8] sm:$0xf]
    %v243 = vld [vmem:[#allocation4 + $0xfc] sm:$0xf]
    %vm244 = vsmask.f32 5376
    %v245 = vrot.slane %v140, 2
    %v246 = vrot.slane %v143, 3
    %v247 = vor.u32 %v245, %v246
    %v248 = vrot.slane %v147, 2
    %v249 = vrot.slane %v150, 3
    %v250 = vor.u32 %v248, %v249
    %v251 = vsel %vm244, %v247, %v250
    %v253 = vshrl.u32 %v145, 16
    %v255 = vrot.slane %v253, 2
    %v256 = vshll.u32 %v145, 16
    %v258 = vrot.slane %v256, 3
    %v259 = vor.u32 %v255, %v258
    %v261 = vshrl.u32 %v153, 16
    %v263 = vrot.slane %v261, 2
    %v264 = vshll.u32 %v153, 16
    %v266 = vrot.slane %v264, 3
    %v267 = vor.u32 %v263, %v266
    %v268 = vsel %vm244, %v259, %v267
    %v270 = vshrl.u32 %v168, 16
    %v272 = vrot.slane %v270, 2
    %v273 = vshll.u32 %v168, 16
    %v275 = vrot.slane %v273, 3
    %v276 = vor.u32 %v272, %v275
    %v278 = vshrl.u32 %v173, 16
    %v280 = vrot.slane %v278, 2
    %v281 = vshll.u32 %v173, 16
    %v283 = vrot.slane %v281, 3
    %v284 = vor.u32 %v280, %v283
    %v285 = vsel %vm244, %v276, %v284
    %v287 = vshrl.u32 %v179, 16
    %v289 = vrot.slane %v287, 2
    %v290 = vshll.u32 %v179, 16
    %v292 = vrot.slane %v290, 3
    %v293 = vor.u32 %v289, %v292
    %v294 = vsel %vm244, %v293, %v293
    %v363 = vunpack.c.l.b16 %v180
    %v364 = vunpack.c.l.b16 %v181
    %v365 = vunpack.c.l.b16 %v182
    %v366 = vunpack.c.l.b16 %v183
    %v367 = vunpack.c.l.b16 %v184
    %v368 = vunpack.c.l.b16 %v185
    %v369 = vunpack.c.l.b16 %v186
    %v370 = vunpack.c.l.b16 %v187
    %v371 = vunpack.c.l.b16 %v188
    %v372 = vunpack.c.l.b16 %v189
    %v373 = vunpack.c.l.b16 %v190
    %v374 = vunpack.c.l.b16 %v191
    %v375 = vunpack.c.l.b16 %v192
    %v376 = vunpack.c.l.b16 %v193
    %v377 = vunpack.c.l.b16 %v194
    %v378 = vunpack.c.l.b16 %v195
    %v379 = vunpack.c.l.b16 %v196
    %v380 = vunpack.c.l.b16 %v197
    %v381 = vunpack.c.l.b16 %v198
    %v382 = vunpack.c.l.b16 %v199
    %v383 = vunpack.c.l.b16 %v200
    %v384 = vunpack.c.l.b16 %v201
    %v385 = vunpack.c.l.b16 %v202
    %v386 = vunpack.c.l.b16 %v203
    %v387 = vunpack.c.l.b16 %v204
    %v388 = vunpack.c.l.b16 %v205
    %v389 = vunpack.c.l.b16 %v206
    %v390 = vunpack.c.l.b16 %v207
    %v391 = vunpack.c.l.b16 %v208
    %v392 = vunpack.c.l.b16 %v209
    %v393 = vunpack.c.l.b16 %v210
    %v394 = vunpack.c.l.b16 %v211
    %v395 = vunpack.c.l.b16 %v212
    %v396 = vunpack.c.l.b16 %v213
    %v397 = vunpack.c.l.b16 %v214
    %v398 = vunpack.c.l.b16 %v215
    %v399 = vunpack.c.l.b16 %v216
    %v400 = vunpack.c.l.b16 %v217
    %v401 = vunpack.c.l.b16 %v218
    %v402 = vunpack.c.l.b16 %v219
    %v403 = vunpack.c.l.b16 %v220
    %v404 = vunpack.c.l.b16 %v221
    %v405 = vunpack.c.l.b16 %v222
    %v406 = vunpack.c.l.b16 %v223
    %v407 = vunpack.c.l.b16 %v224
    %v408 = vunpack.c.l.b16 %v225
    %v409 = vunpack.c.l.b16 %v226
    %v410 = vunpack.c.l.b16 %v227
    %v411 = vunpack.c.l.b16 %v228
    %v412 = vunpack.c.l.b16 %v229
    %v413 = vunpack.c.l.b16 %v230
    %v414 = vunpack.c.l.b16 %v231
    %v415 = vunpack.c.l.b16 %v232
    %v416 = vunpack.c.l.b16 %v233
    %v417 = vunpack.c.l.b16 %v234
    %v418 = vunpack.c.l.b16 %v235
    %v419 = vunpack.c.l.b16 %v236
    %v420 = vunpack.c.l.b16 %v237
    %v421 = vunpack.c.l.b16 %v238
    %v422 = vunpack.c.l.b16 %v239
    %v423 = vunpack.c.l.b16 %v240
    %v424 = vunpack.c.l.b16 %v241
    %v425 = vunpack.c.l.b16 %v242
    %v426 = vunpack.c.l.b16 %v243
    %v427 = vpack.c.b16 %v364, %v363
    %v428 = vpack.c.b16 %v366, %v365
    %v429 = vpack.c.b16 %v368, %v367
    %v430 = vpack.c.b16 %v370, %v369
    %v431 = vpack.c.b16 %v372, %v371
    %v432 = vpack.c.b16 %v374, %v373
    %v433 = vpack.c.b16 %v376, %v375
    %v434 = vpack.c.b16 %v378, %v377
    %v435 = vpack.c.b16 %v380, %v379
    %v436 = vpack.c.b16 %v382, %v381
    %v437 = vpack.c.b16 %v384, %v383
    %v438 = vpack.c.b16 %v386, %v385
    %v439 = vpack.c.b16 %v388, %v387
    %v440 = vpack.c.b16 %v390, %v389
    %v441 = vpack.c.b16 %v392, %v391
    %v442 = vpack.c.b16 %v394, %v393
    %v443 = vpack.c.b16 %v396, %v395
    %v444 = vpack.c.b16 %v398, %v397
    %v445 = vpack.c.b16 %v400, %v399
    %v446 = vpack.c.b16 %v402, %v401
    %v447 = vpack.c.b16 %v404, %v403
    %v448 = vpack.c.b16 %v406, %v405
    %v449 = vpack.c.b16 %v408, %v407
    %v450 = vpack.c.b16 %v410, %v409
    %v451 = vpack.c.b16 %v412, %v411
    %v452 = vpack.c.b16 %v414, %v413
    %v453 = vpack.c.b16 %v416, %v415
    %v454 = vpack.c.b16 %v418, %v417
    %v455 = vpack.c.b16 %v420, %v419
    %v456 = vpack.c.b16 %v422, %v421
    %v457 = vpack.c.b16 %v424, %v423
    %v458 = vpack.c.b16 %v426, %v425
    %491 = vmatprep.subr.bf16.mxu0 0
    %492 = vmatpush1.bf16.msra.mxu0 %v434
    %493 = vmatprep.subr.bf16.mxu0 0
    %494 = vmatpush1.bf16.msra.mxu0 %v433
    %495 = vmatprep.subr.bf16.mxu0 0
    %496 = vmatpush1.bf16.msra.mxu0 %v432
    %497 = vmatprep.subr.bf16.mxu0 0
    %498 = vmatpush1.bf16.msra.mxu0 %v431
    %499 = vmatprep.subr.bf16.mxu0 0
    %500 = vmatpush1.bf16.msra.mxu0 %v430
    %501 = vmatprep.subr.bf16.mxu0 0
    %502 = vmatpush1.bf16.msra.mxu0 %v429
    %503 = vmatprep.subr.bf16.mxu0 0
    %504 = vmatpush1.bf16.msra.mxu0 %v428
    %505 = vmatprep.subr.bf16.mxu0 0
    %506 = vmatpush1.bf16.msra.mxu0 %v427
    %507 = vmatprep.subr.bf16.mxu0 0
    %508 = vmatpush2.bf16.msra.mxu0 %v442
    %509 = vmatprep.subr.bf16.mxu0 0
    %510 = vmatpush2.bf16.msra.mxu0 %v441
    %511 = vmatprep.subr.bf16.mxu0 0
    %512 = vmatpush2.bf16.msra.mxu0 %v440
    %513 = vmatprep.subr.bf16.mxu0 0
    %514 = vmatpush2.bf16.msra.mxu0 %v439
    %515 = vmatprep.subr.bf16.mxu0 0
    %516 = vmatpush2.bf16.msra.mxu0 %v438
    %517 = vmatprep.subr.bf16.mxu0 0
    %518 = vmatpush2.bf16.msra.mxu0 %v437
    %519 = vmatprep.subr.bf16.mxu0 0
    %520 = vmatpush2.bf16.msra.mxu0 %v436
    %521 = vmatprep.subr.bf16.mxu0 0
    %522 = vmatpush2.bf16.msra.mxu0 %v435
    %523 = vmatprep.mubr.bf16.mxu0 %v268
    %524 = vmatmul.mubr.bf16.gmra.mxu0 %v251
    %v525 = vpop.f32.mrf.mxu0
    %v526 = vadd.f32 0.0, %v525
    %v527 = vpop.f32.mrf.mxu0
    %v528 = vpop.f32.mrf.mxu0
    %v529 = vadd.f32 0.0, %v528
    %v530 = vpop.f32.mrf.mxu0
    %531 = vdwg.mxu0
    %532 = vmatprep.subr.bf16.mxu0 0
    %533 = vmatpush1.bf16.msra.mxu0 %v450
    %534 = vmatprep.subr.bf16.mxu0 0
    %535 = vmatpush1.bf16.msra.mxu0 %v449
    %536 = vmatprep.subr.bf16.mxu0 0
    %537 = vmatpush1.bf16.msra.mxu0 %v448
    %538 = vmatprep.subr.bf16.mxu0 0
    %539 = vmatpush1.bf16.msra.mxu0 %v447
    %540 = vmatprep.subr.bf16.mxu0 0
    %541 = vmatpush1.bf16.msra.mxu0 %v446
    %542 = vmatprep.subr.bf16.mxu0 0
    %543 = vmatpush1.bf16.msra.mxu0 %v445
    %544 = vmatprep.subr.bf16.mxu0 0
    %545 = vmatpush1.bf16.msra.mxu0 %v444
    %546 = vmatprep.subr.bf16.mxu0 0
    %547 = vmatpush1.bf16.msra.mxu0 %v443
    %548 = vmatprep.subr.bf16.mxu0 0
    %549 = vmatpush2.bf16.msra.mxu0 %v458
    %550 = vmatprep.subr.bf16.mxu0 0
    %551 = vmatpush2.bf16.msra.mxu0 %v457
    %552 = vmatprep.subr.bf16.mxu0 0
    %553 = vmatpush2.bf16.msra.mxu0 %v456
    %554 = vmatprep.subr.bf16.mxu0 0
    %555 = vmatpush2.bf16.msra.mxu0 %v455
    %556 = vmatprep.subr.bf16.mxu0 0
    %557 = vmatpush2.bf16.msra.mxu0 %v454
    %558 = vmatprep.subr.bf16.mxu0 0
    %559 = vmatpush2.bf16.msra.mxu0 %v453
    %560 = vmatprep.subr.bf16.mxu0 0
    %561 = vmatpush2.bf16.msra.mxu0 %v452
    %562 = vmatprep.subr.bf16.mxu0 0
    %563 = vmatpush2.bf16.msra.mxu0 %v451
    %564 = vmatprep.mubr.bf16.mxu0 %v294
    %565 = vmatmul.mubr.bf16.gmra.mxu0 %v285
    %v566 = vpop.f32.mrf.mxu0
    %v567 = vadd.f32 %v526, %v566
    %v568 = vpop.f32.mrf.mxu0
    %v569 = vpop.f32.mrf.mxu0
    %v570 = vadd.f32 %v529, %v569
    %v571 = vpop.f32.mrf.mxu0
    %572 = vdwg.mxu0
    %v573 = vmul.f32 %v567, %v121
    %v574 = vmul.f32 %v570, %v122
    %vm575 = vcmask 1046528
    %v576 = vsel %vm575, %v574, 0.0
    %v577 = vadd.f32 %v573, %v576
    %v578 = vrot.slane %v577, 4
    %v579 = vadd.f32 %v577, %v578
    %v580 = vrot.slane %v579, 2
    %v581 = vadd.f32 %v579, %v580
    %v582 = vrot.slane %v581, 1
    %v583 = vadd.f32 %v581, %v582
    %v584 = vadd.f32 %v583, 0.0
    %v585 = vmul.f32 %v573, %v567
    %v586 = vmul.f32 %v574, %v570
    %v587 = vsel %vm575, %v586, 0.0
    %v588 = vadd.f32 %v585, %v587
    %v589 = vrot.slane %v588, 4
    %v590 = vadd.f32 %v588, %v589
    %v591 = vrot.slane %v590, 2
    %v592 = vadd.f32 %v590, %v591
    %v593 = vrot.slane %v592, 1
    %v594 = vadd.f32 %v592, %v593
    %v595 = vadd.f32 %v594, 0.0
    %v596 = vld [vmem:[#allocation2] sm:$0x8]
    %v597 = vld [vmem:[#allocation2 + $0x8] sm:$0x7]
    %v600 = vunpack.c.l.b16 %v596
    %v601 = vunpack.c.l.b16 %v597
    %v602 = vpack.c.b16 %v134, %v600
    %v603 = vpack.c.b16 %v601, %v601
    %vm604 = vsmask.f32 7424
    %v606 = vshrl.u32 %v602, 16
    %v608 = vshll.u32 %v602, 16
    %v610 = vrot.slane %v608, 1
    %v611 = vor.u32 %v606, %v610
    %v613 = vshll.u32 %v603, 16
    %v615 = vrot.slane %v613, 1
    %v616 = vsel %vm604, %v611, %v615
    %v617 = vshrl.u32 %v603, 16
    %v619 = vor.u32 %v617, %v615
    %vm620 = vcmask 1040384
    %v621 = vrot.slane %v158, 7
    %v622 = vrot.slane %v159, 7
    %v623 = vsel %vm620, %v621, %v622
    %s624 = scalar_lea.vmem [#allocation4], 256
    %v625 = vld [vmem:[%s624] sm:$0xf]
    %v626 = vld [vmem:[%s624 + $0x4] sm:$0xf]
    %v627 = vld [vmem:[%s624 + $0x8] sm:$0xf]
    %v628 = vld [vmem:[%s624 + $0xc] sm:$0xf]
    %v629 = vld [vmem:[%s624 + $0x10] sm:$0xf]
    %v630 = vld [vmem:[%s624 + $0x14] sm:$0xf]
    %v631 = vld [vmem:[%s624 + $0x18] sm:$0xf]
    %v632 = vld [vmem:[%s624 + $0x1c] sm:$0xf]
    %v633 = vld [vmem:[%s624 + $0x20] sm:$0xf]
    %v634 = vld [vmem:[%s624 + $0x24] sm:$0xf]
    %v635 = vld [vmem:[%s624 + $0x28] sm:$0xf]
    %v636 = vld [vmem:[%s624 + $0x2c] sm:$0xf]
    %v637 = vld [vmem:[%s624 + $0x30] sm:$0xf]
    %v638 = vld [vmem:[%s624 + $0x34] sm:$0xf]
    %v639 = vld [vmem:[%s624 + $0x38] sm:$0xf]
    %v640 = vld [vmem:[%s624 + $0x3c] sm:$0xf]
    %v641 = vld [vmem:[%s624 + $0x40] sm:$0xf]
    %v642 = vld [vmem:[%s624 + $0x44] sm:$0xf]
    %v643 = vld [vmem:[%s624 + $0x48] sm:$0xf]
    %v644 = vld [vmem:[%s624 + $0x4c] sm:$0xf]
    %v645 = vld [vmem:[%s624 + $0x50] sm:$0xf]
    %v646 = vld [vmem:[%s624 + $0x54] sm:$0xf]
    %v647 = vld [vmem:[%s624 + $0x58] sm:$0xf]
    %v648 = vld [vmem:[%s624 + $0x5c] sm:$0xf]
    %v649 = vld [vmem:[%s624 + $0x60] sm:$0xf]
    %v650 = vld [vmem:[%s624 + $0x64] sm:$0xf]
    %v651 = vld [vmem:[%s624 + $0x68] sm:$0xf]
    %v652 = vld [vmem:[%s624 + $0x6c] sm:$0xf]
    %v653 = vld [vmem:[%s624 + $0x70] sm:$0xf]
    %v654 = vld [vmem:[%s624 + $0x74] sm:$0xf]
    %v655 = vld [vmem:[%s624 + $0x78] sm:$0xf]
    %v656 = vld [vmem:[%s624 + $0x7c] sm:$0xf]
    %v657 = vld [vmem:[%s624 + $0x80] sm:$0xf]
    %v658 = vld [vmem:[%s624 + $0x84] sm:$0xf]
    %v659 = vld [vmem:[%s624 + $0x88] sm:$0xf]
    %v660 = vld [vmem:[%s624 + $0x8c] sm:$0xf]
    %v661 = vld [vmem:[%s624 + $0x90] sm:$0xf]
    %v662 = vld [vmem:[%s624 + $0x94] sm:$0xf]
    %v663 = vld [vmem:[%s624 + $0x98] sm:$0xf]
    %v664 = vld [vmem:[%s624 + $0x9c] sm:$0xf]
    %v665 = vld [vmem:[%s624 + $0xa0] sm:$0xf]
    %v666 = vld [vmem:[%s624 + $0xa4] sm:$0xf]
    %v667 = vld [vmem:[%s624 + $0xa8] sm:$0xf]
    %v668 = vld [vmem:[%s624 + $0xac] sm:$0xf]
    %v669 = vld [vmem:[%s624 + $0xb0] sm:$0xf]
    %v670 = vld [vmem:[%s624 + $0xb4] sm:$0xf]
    %v671 = vld [vmem:[%s624 + $0xb8] sm:$0xf]
    %v672 = vld [vmem:[%s624 + $0xbc] sm:$0xf]
    %v673 = vld [vmem:[%s624 + $0xc0] sm:$0xf]
    %v674 = vld [vmem:[%s624 + $0xc4] sm:$0xf]
    %v675 = vld [vmem:[%s624 + $0xc8] sm:$0xf]
    %v676 = vld [vmem:[%s624 + $0xcc] sm:$0xf]
    %v677 = vld [vmem:[%s624 + $0xd0] sm:$0xf]
    %v678 = vld [vmem:[%s624 + $0xd4] sm:$0xf]
    %v679 = vld [vmem:[%s624 + $0xd8] sm:$0xf]
    %v680 = vld [vmem:[%s624 + $0xdc] sm:$0xf]
    %v681 = vld [vmem:[%s624 + $0xe0] sm:$0xf]
    %v682 = vld [vmem:[%s624 + $0xe4] sm:$0xf]
    %v683 = vld [vmem:[%s624 + $0xe8] sm:$0xf]
    %v684 = vld [vmem:[%s624 + $0xec] sm:$0xf]
    %v685 = vld [vmem:[%s624 + $0xf0] sm:$0xf]
    %v686 = vld [vmem:[%s624 + $0xf4] sm:$0xf]
    %v687 = vld [vmem:[%s624 + $0xf8] sm:$0xf]
    %v688 = vld [vmem:[%s624 + $0xfc] sm:$0xf]
    %v690 = vshrl.u32 %v616, 16
    %v692 = vrot.slane %v690, 2
    %v693 = vshll.u32 %v616, 16
    %v695 = vrot.slane %v693, 3
    %v696 = vor.u32 %v692, %v695
    %v698 = vshrl.u32 %v619, 16
    %v700 = vrot.slane %v698, 2
    %v701 = vshll.u32 %v619, 16
    %v703 = vrot.slane %v701, 3
    %v704 = vor.u32 %v700, %v703
    %v705 = vsel %vm244, %v696, %v704
    %v707 = vshrl.u32 %v621, 16
    %v709 = vrot.slane %v707, 2
    %v710 = vshll.u32 %v621, 16
    %v712 = vrot.slane %v710, 3
    %v713 = vor.u32 %v709, %v712
    %v715 = vshrl.u32 %v623, 16
    %v717 = vrot.slane %v715, 2
    %v718 = vshll.u32 %v623, 16
    %v720 = vrot.slane %v718, 3
    %v721 = vor.u32 %v717, %v720
    %v722 = vsel %vm244, %v713, %v721
    %v789 = vunpack.c.l.b16 %v625
    %v790 = vunpack.c.l.b16 %v626
    %v791 = vunpack.c.l.b16 %v627
    %v792 = vunpack.c.l.b16 %v628
    %v793 = vunpack.c.l.b16 %v629
    %v794 = vunpack.c.l.b16 %v630
    %v795 = vunpack.c.l.b16 %v631
    %v796 = vunpack.c.l.b16 %v632
    %v797 = vunpack.c.l.b16 %v633
    %v798 = vunpack.c.l.b16 %v634
    %v799 = vunpack.c.l.b16 %v635
    %v800 = vunpack.c.l.b16 %v636
    %v801 = vunpack.c.l.b16 %v637
    %v802 = vunpack.c.l.b16 %v638
    %v803 = vunpack.c.l.b16 %v639
    %v804 = vunpack.c.l.b16 %v640
    %v805 = vunpack.c.l.b16 %v641
    %v806 = vunpack.c.l.b16 %v642
    %v807 = vunpack.c.l.b16 %v643
    %v808 = vunpack.c.l.b16 %v644
    %v809 = vunpack.c.l.b16 %v645
    %v810 = vunpack.c.l.b16 %v646
    %v811 = vunpack.c.l.b16 %v647
    %v812 = vunpack.c.l.b16 %v648
    %v813 = vunpack.c.l.b16 %v649
    %v814 = vunpack.c.l.b16 %v650
    %v815 = vunpack.c.l.b16 %v651
    %v816 = vunpack.c.l.b16 %v652
    %v817 = vunpack.c.l.b16 %v653
    %v818 = vunpack.c.l.b16 %v654
    %v819 = vunpack.c.l.b16 %v655
    %v820 = vunpack.c.l.b16 %v656
    %v821 = vunpack.c.l.b16 %v657
    %v822 = vunpack.c.l.b16 %v658
    %v823 = vunpack.c.l.b16 %v659
    %v824 = vunpack.c.l.b16 %v660
    %v825 = vunpack.c.l.b16 %v661
    %v826 = vunpack.c.l.b16 %v662
    %v827 = vunpack.c.l.b16 %v663
    %v828 = vunpack.c.l.b16 %v664
    %v829 = vunpack.c.l.b16 %v665
    %v830 = vunpack.c.l.b16 %v666
    %v831 = vunpack.c.l.b16 %v667
    %v832 = vunpack.c.l.b16 %v668
    %v833 = vunpack.c.l.b16 %v669
    %v834 = vunpack.c.l.b16 %v670
    %v835 = vunpack.c.l.b16 %v671
    %v836 = vunpack.c.l.b16 %v672
    %v837 = vunpack.c.l.b16 %v673
    %v838 = vunpack.c.l.b16 %v674
    %v839 = vunpack.c.l.b16 %v675
    %v840 = vunpack.c.l.b16 %v676
    %v841 = vunpack.c.l.b16 %v677
    %v842 = vunpack.c.l.b16 %v678
    %v843 = vunpack.c.l.b16 %v679
    %v844 = vunpack.c.l.b16 %v680
    %v845 = vunpack.c.l.b16 %v681
    %v846 = vunpack.c.l.b16 %v682
    %v847 = vunpack.c.l.b16 %v683
    %v848 = vunpack.c.l.b16 %v684
    %v849 = vunpack.c.l.b16 %v685
    %v850 = vunpack.c.l.b16 %v686
    %v851 = vunpack.c.l.b16 %v687
    %v852 = vunpack.c.l.b16 %v688
    %v853 = vpack.c.b16 %v790, %v789
    %v854 = vpack.c.b16 %v792, %v791
    %v855 = vpack.c.b16 %v794, %v793
    %v856 = vpack.c.b16 %v796, %v795
    %v857 = vpack.c.b16 %v798, %v797
    %v858 = vpack.c.b16 %v800, %v799
    %v859 = vpack.c.b16 %v802, %v801
    %v860 = vpack.c.b16 %v804, %v803
    %v861 = vpack.c.b16 %v806, %v805
    %v862 = vpack.c.b16 %v808, %v807
    %v863 = vpack.c.b16 %v810, %v809
    %v864 = vpack.c.b16 %v812, %v811
    %v865 = vpack.c.b16 %v814, %v813
    %v866 = vpack.c.b16 %v816, %v815
    %v867 = vpack.c.b16 %v818, %v817
    %v868 = vpack.c.b16 %v820, %v819
    %v869 = vpack.c.b16 %v822, %v821
    %v870 = vpack.c.b16 %v824, %v823
    %v871 = vpack.c.b16 %v826, %v825
    %v872 = vpack.c.b16 %v828, %v827
    %v873 = vpack.c.b16 %v830, %v829
    %v874 = vpack.c.b16 %v832, %v831
    %v875 = vpack.c.b16 %v834, %v833
    %v876 = vpack.c.b16 %v836, %v835
    %v877 = vpack.c.b16 %v838, %v837
    %v878 = vpack.c.b16 %v840, %v839
    %v879 = vpack.c.b16 %v842, %v841
    %v880 = vpack.c.b16 %v844, %v843
    %v881 = vpack.c.b16 %v846, %v845
    %v882 = vpack.c.b16 %v848, %v847
    %v883 = vpack.c.b16 %v850, %v849
    %v884 = vpack.c.b16 %v852, %v851
    %917 = vmatprep.subr.bf16.mxu0 0
    %918 = vmatpush1.bf16.msra.mxu0 %v860
    %919 = vmatprep.subr.bf16.mxu0 0
    %920 = vmatpush1.bf16.msra.mxu0 %v859
    %921 = vmatprep.subr.bf16.mxu0 0
    %922 = vmatpush1.bf16.msra.mxu0 %v858
    %923 = vmatprep.subr.bf16.mxu0 0
    %924 = vmatpush1.bf16.msra.mxu0 %v857
    %925 = vmatprep.subr.bf16.mxu0 0
    %926 = vmatpush1.bf16.msra.mxu0 %v856
    %927 = vmatprep.subr.bf16.mxu0 0
    %928 = vmatpush1.bf16.msra.mxu0 %v855
    %929 = vmatprep.subr.bf16.mxu0 0
    %930 = vmatpush1.bf16.msra.mxu0 %v854
    %931 = vmatprep.subr.bf16.mxu0 0
    %932 = vmatpush1.bf16.msra.mxu0 %v853
    %933 = vmatprep.subr.bf16.mxu0 0
    %934 = vmatpush2.bf16.msra.mxu0 %v868
    %935 = vmatprep.subr.bf16.mxu0 0
    %936 = vmatpush2.bf16.msra.mxu0 %v867
    %937 = vmatprep.subr.bf16.mxu0 0
    %938 = vmatpush2.bf16.msra.mxu0 %v866
    %939 = vmatprep.subr.bf16.mxu0 0
    %940 = vmatpush2.bf16.msra.mxu0 %v865
    %941 = vmatprep.subr.bf16.mxu0 0
    %942 = vmatpush2.bf16.msra.mxu0 %v864
    %943 = vmatprep.subr.bf16.mxu0 0
    %944 = vmatpush2.bf16.msra.mxu0 %v863
    %945 = vmatprep.subr.bf16.mxu0 0
    %946 = vmatpush2.bf16.msra.mxu0 %v862
    %947 = vmatprep.subr.bf16.mxu0 0
    %948 = vmatpush2.bf16.msra.mxu0 %v861
    %949 = vmatprep.mubr.bf16.mxu0 %v705
    %950 = vmatmul.mubr.bf16.gmra.mxu0 %v251
    %v951 = vpop.f32.mrf.mxu0
    %v952 = vadd.f32 0.0, %v951
    %v953 = vpop.f32.mrf.mxu0
    %v954 = vpop.f32.mrf.mxu0
    %v955 = vadd.f32 0.0, %v954
    %v956 = vpop.f32.mrf.mxu0
    %957 = vdwg.mxu0
    %958 = vmatprep.subr.bf16.mxu0 0
    %959 = vmatpush1.bf16.msra.mxu0 %v876
    %960 = vmatprep.subr.bf16.mxu0 0
    %961 = vmatpush1.bf16.msra.mxu0 %v875
    %962 = vmatprep.subr.bf16.mxu0 0
    %963 = vmatpush1.bf16.msra.mxu0 %v874
    %964 = vmatprep.subr.bf16.mxu0 0
    %965 = vmatpush1.bf16.msra.mxu0 %v873
    %966 = vmatprep.subr.bf16.mxu0 0
    %967 = vmatpush1.bf16.msra.mxu0 %v872
    %968 = vmatprep.subr.bf16.mxu0 0
    %969 = vmatpush1.bf16.msra.mxu0 %v871
    %970 = vmatprep.subr.bf16.mxu0 0
    %971 = vmatpush1.bf16.msra.mxu0 %v870
    %972 = vmatprep.subr.bf16.mxu0 0
    %973 = vmatpush1.bf16.msra.mxu0 %v869
    %974 = vmatprep.subr.bf16.mxu0 0
    %975 = vmatpush2.bf16.msra.mxu0 %v884
    %976 = vmatprep.subr.bf16.mxu0 0
    %977 = vmatpush2.bf16.msra.mxu0 %v883
    %978 = vmatprep.subr.bf16.mxu0 0
    %979 = vmatpush2.bf16.msra.mxu0 %v882
    %980 = vmatprep.subr.bf16.mxu0 0
    %981 = vmatpush2.bf16.msra.mxu0 %v881
    %982 = vmatprep.subr.bf16.mxu0 0
    %983 = vmatpush2.bf16.msra.mxu0 %v880
    %984 = vmatprep.subr.bf16.mxu0 0
    %985 = vmatpush2.bf16.msra.mxu0 %v879
    %986 = vmatprep.subr.bf16.mxu0 0
    %987 = vmatpush2.bf16.msra.mxu0 %v878
    %988 = vmatprep.subr.bf16.mxu0 0
    %989 = vmatpush2.bf16.msra.mxu0 %v877
    %990 = vmatprep.mubr.bf16.mxu0 %v722
    %991 = vmatmul.mubr.bf16.gmra.mxu0 %v285
    %v992 = vpop.f32.mrf.mxu0
    %v993 = vadd.f32 %v952, %v992
    %v994 = vpop.f32.mrf.mxu0
    %v995 = vpop.f32.mrf.mxu0
    %v996 = vadd.f32 %v955, %v995
    %v997 = vpop.f32.mrf.mxu0
    %998 = vdwg.mxu0
    %v999 = vmul.f32 %v993, %v121
    %v1000 = vmul.f32 %v996, %v122
    %v1001 = vsel %vm575, %v1000, 0.0
    %v1002 = vadd.f32 %v999, %v1001
    %v1003 = vrot.slane %v1002, 4
    %v1004 = vadd.f32 %v1002, %v1003
    %v1005 = vrot.slane %v1004, 2
    %v1006 = vadd.f32 %v1004, %v1005
    %v1007 = vrot.slane %v1006, 1
    %v1008 = vadd.f32 %v1006, %v1007
    %v1009 = vadd.f32 %v584, %v1008
    %v1010 = vmul.f32 %v999, %v993
    %v1011 = vmul.f32 %v1000, %v996
    %v1012 = vsel %vm575, %v1011, 0.0
    %v1013 = vadd.f32 %v1010, %v1012
    %v1014 = vrot.slane %v1013, 4
    %v1015 = vadd.f32 %v1013, %v1014
    %v1016 = vrot.slane %v1015, 2
    %v1017 = vadd.f32 %v1015, %v1016
    %v1018 = vrot.slane %v1017, 1
    %v1019 = vadd.f32 %v1017, %v1018
    %v1020 = vadd.f32 %v595, %v1019
    %v1021 = vld [vmem:[#allocation2 + $0x8] sm:$0xf]
    %v1023 = vunpack.c.l.b16 %v1021
    %v1024 = vpack.c.b16 %v1023, %v134
    %v1026 = vshrl.u32 %v1024, 16
    %v1028 = vrot.slane %v1026, 5
    %v1029 = vshll.u32 %v1024, 16
    %v1031 = vrot.slane %v1029, 6
    %v1032 = vor.u32 %v1028, %v1031
    %vm1033 = vcmask 1046528
    %v1034 = vrot.slane %v602, 1
    %v1035 = vrot.slane %v603, 1
    %v1036 = vsel %vm1033, %v1034, %v1035
    %s1037 = scalar_lea.vmem [#allocation4], 512
    %v1038 = vld [vmem:[%s1037] sm:$0xf]
    %v1039 = vld [vmem:[%s1037 + $0x4] sm:$0xf]
    %v1040 = vld [vmem:[%s1037 + $0x8] sm:$0xf]
    %v1041 = vld [vmem:[%s1037 + $0xc] sm:$0xf]
    %v1042 = vld [vmem:[%s1037 + $0x10] sm:$0xf]
    %v1043 = vld [vmem:[%s1037 + $0x14] sm:$0xf]
    %v1044 = vld [vmem:[%s1037 + $0x18] sm:$0xf]
    %v1045 = vld [vmem:[%s1037 + $0x1c] sm:$0xf]
    %v1046 = vld [vmem:[%s1037 + $0x20] sm:$0xf]
    %v1047 = vld [vmem:[%s1037 + $0x24] sm:$0xf]
    %v1048 = vld [vmem:[%s1037 + $0x28] sm:$0xf]
    %v1049 = vld [vmem:[%s1037 + $0x2c] sm:$0xf]
    %v1050 = vld [vmem:[%s1037 + $0x30] sm:$0xf]
    %v1051 = vld [vmem:[%s1037 + $0x34] sm:$0xf]
    %v1052 = vld [vmem:[%s1037 + $0x38] sm:$0xf]
    %v1053 = vld [vmem:[%s1037 + $0x3c] sm:$0xf]
    %v1054 = vld [vmem:[%s1037 + $0x40] sm:$0xf]
    %v1055 = vld [vmem:[%s1037 + $0x44] sm:$0xf]
    %v1056 = vld [vmem:[%s1037 + $0x48] sm:$0xf]
    %v1057 = vld [vmem:[%s1037 + $0x4c] sm:$0xf]
    %v1058 = vld [vmem:[%s1037 + $0x50] sm:$0xf]
    %v1059 = vld [vmem:[%s1037 + $0x54] sm:$0xf]
    %v1060 = vld [vmem:[%s1037 + $0x58] sm:$0xf]
    %v1061 = vld [vmem:[%s1037 + $0x5c] sm:$0xf]
    %v1062 = vld [vmem:[%s1037 + $0x60] sm:$0xf]
    %v1063 = vld [vmem:[%s1037 + $0x64] sm:$0xf]
    %v1064 = vld [vmem:[%s1037 + $0x68] sm:$0xf]
    %v1065 = vld [vmem:[%s1037 + $0x6c] sm:$0xf]
    %v1066 = vld [vmem:[%s1037 + $0x70] sm:$0xf]
    %v1067 = vld [vmem:[%s1037 + $0x74] sm:$0xf]
    %v1068 = vld [vmem:[%s1037 + $0x78] sm:$0xf]
    %v1069 = vld [vmem:[%s1037 + $0x7c] sm:$0xf]
    %v1070 = vld [vmem:[%s1037 + $0x80] sm:$0xf]
    %v1071 = vld [vmem:[%s1037 + $0x84] sm:$0xf]
    %v1072 = vld [vmem:[%s1037 + $0x88] sm:$0xf]
    %v1073 = vld [vmem:[%s1037 + $0x8c] sm:$0xf]
    %v1074 = vld [vmem:[%s1037 + $0x90] sm:$0xf]
    %v1075 = vld [vmem:[%s1037 + $0x94] sm:$0xf]
    %v1076 = vld [vmem:[%s1037 + $0x98] sm:$0xf]
    %v1077 = vld [vmem:[%s1037 + $0x9c] sm:$0xf]
    %v1078 = vld [vmem:[%s1037 + $0xa0] sm:$0xf]
    %v1079 = vld [vmem:[%s1037 + $0xa4] sm:$0xf]
    %v1080 = vld [vmem:[%s1037 + $0xa8] sm:$0xf]
    %v1081 = vld [vmem:[%s1037 + $0xac] sm:$0xf]
    %v1082 = vld [vmem:[%s1037 + $0xb0] sm:$0xf]
    %v1083 = vld [vmem:[%s1037 + $0xb4] sm:$0xf]
    %v1084 = vld [vmem:[%s1037 + $0xb8] sm:$0xf]
    %v1085 = vld [vmem:[%s1037 + $0xbc] sm:$0xf]
    %v1086 = vld [vmem:[%s1037 + $0xc0] sm:$0xf]
    %v1087 = vld [vmem:[%s1037 + $0xc4] sm:$0xf]
    %v1088 = vld [vmem:[%s1037 + $0xc8] sm:$0xf]
    %v1089 = vld [vmem:[%s1037 + $0xcc] sm:$0xf]
    %v1090 = vld [vmem:[%s1037 + $0xd0] sm:$0xf]
    %v1091 = vld [vmem:[%s1037 + $0xd4] sm:$0xf]
    %v1092 = vld [vmem:[%s1037 + $0xd8] sm:$0xf]
    %v1093 = vld [vmem:[%s1037 + $0xdc] sm:$0xf]
    %v1094 = vld [vmem:[%s1037 + $0xe0] sm:$0xf]
    %v1095 = vld [vmem:[%s1037 + $0xe4] sm:$0xf]
    %v1096 = vld [vmem:[%s1037 + $0xe8] sm:$0xf]
    %v1097 = vld [vmem:[%s1037 + $0xec] sm:$0xf]
    %v1098 = vld [vmem:[%s1037 + $0xf0] sm:$0xf]
    %v1099 = vld [vmem:[%s1037 + $0xf4] sm:$0xf]
    %v1100 = vld [vmem:[%s1037 + $0xf8] sm:$0xf]
    %v1101 = vld [vmem:[%s1037 + $0xfc] sm:$0xf]
    %v1103 = vshrl.u32 %v1032, 16
    %v1105 = vrot.slane %v1103, 2
    %v1106 = vshll.u32 %v1032, 16
    %v1108 = vrot.slane %v1106, 3
    %v1109 = vor.u32 %v1105, %v1108
    %v1110 = vsel %vm244, %v1109, %v1109
    %v1112 = vshrl.u32 %v1036, 16
    %v1114 = vrot.slane %v1112, 2
    %v1115 = vshll.u32 %v1036, 16
    %v1117 = vrot.slane %v1115, 3
    %v1118 = vor.u32 %v1114, %v1117
    %v1120 = vshrl.u32 %v1035, 16
    %v1122 = vrot.slane %v1120, 2
    %v1123 = vshll.u32 %v1035, 16
    %v1125 = vrot.slane %v1123, 3
    %v1126 = vor.u32 %v1122, %v1125
    %v1127 = vsel %vm244, %v1118, %v1126
    %v1194 = vunpack.c.l.b16 %v1038
    %v1195 = vunpack.c.l.b16 %v1039
    %v1196 = vunpack.c.l.b16 %v1040
    %v1197 = vunpack.c.l.b16 %v1041
    %v1198 = vunpack.c.l.b16 %v1042
    %v1199 = vunpack.c.l.b16 %v1043
    %v1200 = vunpack.c.l.b16 %v1044
    %v1201 = vunpack.c.l.b16 %v1045
    %v1202 = vunpack.c.l.b16 %v1046
    %v1203 = vunpack.c.l.b16 %v1047
    %v1204 = vunpack.c.l.b16 %v1048
    %v1205 = vunpack.c.l.b16 %v1049
    %v1206 = vunpack.c.l.b16 %v1050
    %v1207 = vunpack.c.l.b16 %v1051
    %v1208 = vunpack.c.l.b16 %v1052
    %v1209 = vunpack.c.l.b16 %v1053
    %v1210 = vunpack.c.l.b16 %v1054
    %v1211 = vunpack.c.l.b16 %v1055
    %v1212 = vunpack.c.l.b16 %v1056
    %v1213 = vunpack.c.l.b16 %v1057
    %v1214 = vunpack.c.l.b16 %v1058
    %v1215 = vunpack.c.l.b16 %v1059
    %v1216 = vunpack.c.l.b16 %v1060
    %v1217 = vunpack.c.l.b16 %v1061
    %v1218 = vunpack.c.l.b16 %v1062
    %v1219 = vunpack.c.l.b16 %v1063
    %v1220 = vunpack.c.l.b16 %v1064
    %v1221 = vunpack.c.l.b16 %v1065
    %v1222 = vunpack.c.l.b16 %v1066
    %v1223 = vunpack.c.l.b16 %v1067
    %v1224 = vunpack.c.l.b16 %v1068
    %v1225 = vunpack.c.l.b16 %v1069
    %v1226 = vunpack.c.l.b16 %v1070
    %v1227 = vunpack.c.l.b16 %v1071
    %v1228 = vunpack.c.l.b16 %v1072
    %v1229 = vunpack.c.l.b16 %v1073
    %v1230 = vunpack.c.l.b16 %v1074
    %v1231 = vunpack.c.l.b16 %v1075
    %v1232 = vunpack.c.l.b16 %v1076
    %v1233 = vunpack.c.l.b16 %v1077
    %v1234 = vunpack.c.l.b16 %v1078
    %v1235 = vunpack.c.l.b16 %v1079
    %v1236 = vunpack.c.l.b16 %v1080
    %v1237 = vunpack.c.l.b16 %v1081
    %v1238 = vunpack.c.l.b16 %v1082
    %v1239 = vunpack.c.l.b16 %v1083
    %v1240 = vunpack.c.l.b16 %v1084
    %v1241 = vunpack.c.l.b16 %v1085
    %v1242 = vunpack.c.l.b16 %v1086
    %v1243 = vunpack.c.l.b16 %v1087
    %v1244 = vunpack.c.l.b16 %v1088
    %v1245 = vunpack.c.l.b16 %v1089
    %v1246 = vunpack.c.l.b16 %v1090
    %v1247 = vunpack.c.l.b16 %v1091
    %v1248 = vunpack.c.l.b16 %v1092
    %v1249 = vunpack.c.l.b16 %v1093
    %v1250 = vunpack.c.l.b16 %v1094
    %v1251 = vunpack.c.l.b16 %v1095
    %v1252 = vunpack.c.l.b16 %v1096
    %v1253 = vunpack.c.l.b16 %v1097
    %v1254 = vunpack.c.l.b16 %v1098
    %v1255 = vunpack.c.l.b16 %v1099
    %v1256 = vunpack.c.l.b16 %v1100
    %v1257 = vunpack.c.l.b16 %v1101
    %v1258 = vpack.c.b16 %v1195, %v1194
    %v1259 = vpack.c.b16 %v1197, %v1196
    %v1260 = vpack.c.b16 %v1199, %v1198
    %v1261 = vpack.c.b16 %v1201, %v1200
    %v1262 = vpack.c.b16 %v1203, %v1202
    %v1263 = vpack.c.b16 %v1205, %v1204
    %v1264 = vpack.c.b16 %v1207, %v1206
    %v1265 = vpack.c.b16 %v1209, %v1208
    %v1266 = vpack.c.b16 %v1211, %v1210
    %v1267 = vpack.c.b16 %v1213, %v1212
    %v1268 = vpack.c.b16 %v1215, %v1214
    %v1269 = vpack.c.b16 %v1217, %v1216
    %v1270 = vpack.c.b16 %v1219, %v1218
    %v1271 = vpack.c.b16 %v1221, %v1220
    %v1272 = vpack.c.b16 %v1223, %v1222
    %v1273 = vpack.c.b16 %v1225, %v1224
    %v1274 = vpack.c.b16 %v1227, %v1226
    %v1275 = vpack.c.b16 %v1229, %v1228
    %v1276 = vpack.c.b16 %v1231, %v1230
    %v1277 = vpack.c.b16 %v1233, %v1232
    %v1278 = vpack.c.b16 %v1235, %v1234
    %v1279 = vpack.c.b16 %v1237, %v1236
    %v1280 = vpack.c.b16 %v1239, %v1238
    %v1281 = vpack.c.b16 %v1241, %v1240
    %v1282 = vpack.c.b16 %v1243, %v1242
    %v1283 = vpack.c.b16 %v1245, %v1244
    %v1284 = vpack.c.b16 %v1247, %v1246
    %v1285 = vpack.c.b16 %v1249, %v1248
    %v1286 = vpack.c.b16 %v1251, %v1250
    %v1287 = vpack.c.b16 %v1253, %v1252
    %v1288 = vpack.c.b16 %v1255, %v1254
    %v1289 = vpack.c.b16 %v1257, %v1256
    %1322 = vmatprep.subr.bf16.mxu0 0
    %1323 = vmatpush1.bf16.msra.mxu0 %v1265
    %1324 = vmatprep.subr.bf16.mxu0 0
    %1325 = vmatpush1.bf16.msra.mxu0 %v1264
    %1326 = vmatprep.subr.bf16.mxu0 0
    %1327 = vmatpush1.bf16.msra.mxu0 %v1263
    %1328 = vmatprep.subr.bf16.mxu0 0
    %1329 = vmatpush1.bf16.msra.mxu0 %v1262
    %1330 = vmatprep.subr.bf16.mxu0 0
    %1331 = vmatpush1.bf16.msra.mxu0 %v1261
    %1332 = vmatprep.subr.bf16.mxu0 0
    %1333 = vmatpush1.bf16.msra.mxu0 %v1260
    %1334 = vmatprep.subr.bf16.mxu0 0
    %1335 = vmatpush1.bf16.msra.mxu0 %v1259
    %1336 = vmatprep.subr.bf16.mxu0 0
    %1337 = vmatpush1.bf16.msra.mxu0 %v1258
    %1338 = vmatprep.subr.bf16.mxu0 0
    %1339 = vmatpush2.bf16.msra.mxu0 %v1273
    %1340 = vmatprep.subr.bf16.mxu0 0
    %1341 = vmatpush2.bf16.msra.mxu0 %v1272
    %1342 = vmatprep.subr.bf16.mxu0 0
    %1343 = vmatpush2.bf16.msra.mxu0 %v1271
    %1344 = vmatprep.subr.bf16.mxu0 0
    %1345 = vmatpush2.bf16.msra.mxu0 %v1270
    %1346 = vmatprep.subr.bf16.mxu0 0
    %1347 = vmatpush2.bf16.msra.mxu0 %v1269
    %1348 = vmatprep.subr.bf16.mxu0 0
    %1349 = vmatpush2.bf16.msra.mxu0 %v1268
    %1350 = vmatprep.subr.bf16.mxu0 0
    %1351 = vmatpush2.bf16.msra.mxu0 %v1267
    %1352 = vmatprep.subr.bf16.mxu0 0
    %1353 = vmatpush2.bf16.msra.mxu0 %v1266
    %1354 = vmatprep.mubr.bf16.mxu0 %v268
    %1355 = vmatmul.mubr.bf16.gmra.mxu0 %v251
    %v1356 = vpop.f32.mrf.mxu0
    %v1357 = vadd.f32 0.0, %v1356
    %v1358 = vpop.f32.mrf.mxu0
    %v1359 = vpop.f32.mrf.mxu0
    %v1360 = vadd.f32 0.0, %v1359
    %v1361 = vpop.f32.mrf.mxu0
    %1362 = vdwg.mxu0
    %1363 = vmatprep.subr.bf16.mxu0 0
    %1364 = vmatpush1.bf16.msra.mxu0 %v1281
    %1365 = vmatprep.subr.bf16.mxu0 0
    %1366 = vmatpush1.bf16.msra.mxu0 %v1280
    %1367 = vmatprep.subr.bf16.mxu0 0
    %1368 = vmatpush1.bf16.msra.mxu0 %v1279
    %1369 = vmatprep.subr.bf16.mxu0 0
    %1370 = vmatpush1.bf16.msra.mxu0 %v1278
    %1371 = vmatprep.subr.bf16.mxu0 0
    %1372 = vmatpush1.bf16.msra.mxu0 %v1277
    %1373 = vmatprep.subr.bf16.mxu0 0
    %1374 = vmatpush1.bf16.msra.mxu0 %v1276
    %1375 = vmatprep.subr.bf16.mxu0 0
    %1376 = vmatpush1.bf16.msra.mxu0 %v1275
    %1377 = vmatprep.subr.bf16.mxu0 0
    %1378 = vmatpush1.bf16.msra.mxu0 %v1274
    %1379 = vmatprep.subr.bf16.mxu0 0
    %1380 = vmatpush2.bf16.msra.mxu0 %v1289
    %1381 = vmatprep.subr.bf16.mxu0 0
    %1382 = vmatpush2.bf16.msra.mxu0 %v1288
    %1383 = vmatprep.subr.bf16.mxu0 0
    %1384 = vmatpush2.bf16.msra.mxu0 %v1287
    %1385 = vmatprep.subr.bf16.mxu0 0
    %1386 = vmatpush2.bf16.msra.mxu0 %v1286
    %1387 = vmatprep.subr.bf16.mxu0 0
    %1388 = vmatpush2.bf16.msra.mxu0 %v1285
    %1389 = vmatprep.subr.bf16.mxu0 0
    %1390 = vmatpush2.bf16.msra.mxu0 %v1284
    %1391 = vmatprep.subr.bf16.mxu0 0
    %1392 = vmatpush2.bf16.msra.mxu0 %v1283
    %1393 = vmatprep.subr.bf16.mxu0 0
    %1394 = vmatpush2.bf16.msra.mxu0 %v1282
    %1395 = vmatprep.mubr.bf16.mxu0 %v1127
    %1396 = vmatmul.mubr.bf16.gmra.mxu0 %v1110
    %v1397 = vpop.f32.mrf.mxu0
    %v1398 = vadd.f32 %v1357, %v1397
    %v1399 = vpop.f32.mrf.mxu0
    %v1400 = vpop.f32.mrf.mxu0
    %v1401 = vadd.f32 %v1360, %v1400
    %v1402 = vpop.f32.mrf.mxu0
    %1403 = vdwg.mxu0
    %v1404 = vmul.f32 %v1398, %v121
    %v1405 = vmul.f32 %v1401, %v122
    %v1406 = vsel %vm575, %v1405, 0.0
    %v1407 = vadd.f32 %v1404, %v1406
    %v1408 = vrot.slane %v1407, 4
    %v1409 = vadd.f32 %v1407, %v1408
    %v1410 = vrot.slane %v1409, 2
    %v1411 = vadd.f32 %v1409, %v1410
    %v1412 = vrot.slane %v1411, 1
    %v1413 = vadd.f32 %v1411, %v1412
    %v1414 = vadd.f32 %v1009, %v1413
    %v1415 = vmul.f32 %v1404, %v1398
    %v1416 = vmul.f32 %v1405, %v1401
    %v1417 = vsel %vm575, %v1416, 0.0
    %v1418 = vadd.f32 %v1415, %v1417
    %v1419 = vrot.slane %v1418, 4
    %v1420 = vadd.f32 %v1418, %v1419
    %v1421 = vrot.slane %v1420, 2
    %v1422 = vadd.f32 %v1420, %v1421
    %v1423 = vrot.slane %v1422, 1
    %v1424 = vadd.f32 %v1422, %v1423
    %v1425 = vadd.f32 %v1020, %v1424
    %v1426 = vrot.slane %v1024, 6
    %s1427 = scalar_lea.vmem [#allocation4], 768
    %v1428 = vld [vmem:[%s1427] sm:$0xf]
    %v1429 = vld [vmem:[%s1427 + $0x4] sm:$0xf]
    %v1430 = vld [vmem:[%s1427 + $0x8] sm:$0xf]
    %v1431 = vld [vmem:[%s1427 + $0xc] sm:$0xf]
    %v1432 = vld [vmem:[%s1427 + $0x10] sm:$0xf]
    %v1433 = vld [vmem:[%s1427 + $0x14] sm:$0xf]
    %v1434 = vld [vmem:[%s1427 + $0x18] sm:$0xf]
    %v1435 = vld [vmem:[%s1427 + $0x1c] sm:$0xf]
    %v1436 = vld [vmem:[%s1427 + $0x20] sm:$0xf]
    %v1437 = vld [vmem:[%s1427 + $0x24] sm:$0xf]
    %v1438 = vld [vmem:[%s1427 + $0x28] sm:$0xf]
    %v1439 = vld [vmem:[%s1427 + $0x2c] sm:$0xf]
    %v1440 = vld [vmem:[%s1427 + $0x30] sm:$0xf]
    %v1441 = vld [vmem:[%s1427 + $0x34] sm:$0xf]
    %v1442 = vld [vmem:[%s1427 + $0x38] sm:$0xf]
    %v1443 = vld [vmem:[%s1427 + $0x3c] sm:$0xf]
    %v1444 = vld [vmem:[%s1427 + $0x40] sm:$0xf]
    %v1445 = vld [vmem:[%s1427 + $0x44] sm:$0xf]
    %v1446 = vld [vmem:[%s1427 + $0x48] sm:$0xf]
    %v1447 = vld [vmem:[%s1427 + $0x4c] sm:$0xf]
    %v1448 = vld [vmem:[%s1427 + $0x50] sm:$0xf]
    %v1449 = vld [vmem:[%s1427 + $0x54] sm:$0xf]
    %v1450 = vld [vmem:[%s1427 + $0x58] sm:$0xf]
    %v1451 = vld [vmem:[%s1427 + $0x5c] sm:$0xf]
    %v1452 = vld [vmem:[%s1427 + $0x60] sm:$0xf]
    %v1453 = vld [vmem:[%s1427 + $0x64] sm:$0xf]
    %v1454 = vld [vmem:[%s1427 + $0x68] sm:$0xf]
    %v1455 = vld [vmem:[%s1427 + $0x6c] sm:$0xf]
    %v1456 = vld [vmem:[%s1427 + $0x70] sm:$0xf]
    %v1457 = vld [vmem:[%s1427 + $0x74] sm:$0xf]
    %v1458 = vld [vmem:[%s1427 + $0x78] sm:$0xf]
    %v1459 = vld [vmem:[%s1427 + $0x7c] sm:$0xf]
    %v1460 = vld [vmem:[%s1427 + $0x80] sm:$0xf]
    %v1461 = vld [vmem:[%s1427 + $0x84] sm:$0xf]
    %v1462 = vld [vmem:[%s1427 + $0x88] sm:$0xf]
    %v1463 = vld [vmem:[%s1427 + $0x8c] sm:$0xf]
    %v1464 = vld [vmem:[%s1427 + $0x90] sm:$0xf]
    %v1465 = vld [vmem:[%s1427 + $0x94] sm:$0xf]
    %v1466 = vld [vmem:[%s1427 + $0x98] sm:$0xf]
    %v1467 = vld [vmem:[%s1427 + $0x9c] sm:$0xf]
    %v1468 = vld [vmem:[%s1427 + $0xa0] sm:$0xf]
    %v1469 = vld [vmem:[%s1427 + $0xa4] sm:$0xf]
    %v1470 = vld [vmem:[%s1427 + $0xa8] sm:$0xf]
    %v1471 = vld [vmem:[%s1427 + $0xac] sm:$0xf]
    %v1472 = vld [vmem:[%s1427 + $0xb0] sm:$0xf]
    %v1473 = vld [vmem:[%s1427 + $0xb4] sm:$0xf]
    %v1474 = vld [vmem:[%s1427 + $0xb8] sm:$0xf]
    %v1475 = vld [vmem:[%s1427 + $0xbc] sm:$0xf]
    %v1476 = vld [vmem:[%s1427 + $0xc0] sm:$0xf]
    %v1477 = vld [vmem:[%s1427 + $0xc4] sm:$0xf]
    %v1478 = vld [vmem:[%s1427 + $0xc8] sm:$0xf]
    %v1479 = vld [vmem:[%s1427 + $0xcc] sm:$0xf]
    %v1480 = vld [vmem:[%s1427 + $0xd0] sm:$0xf]
    %v1481 = vld [vmem:[%s1427 + $0xd4] sm:$0xf]
    %v1482 = vld [vmem:[%s1427 + $0xd8] sm:$0xf]
    %v1483 = vld [vmem:[%s1427 + $0xdc] sm:$0xf]
    %v1484 = vld [vmem:[%s1427 + $0xe0] sm:$0xf]
    %v1485 = vld [vmem:[%s1427 + $0xe4] sm:$0xf]
    %v1486 = vld [vmem:[%s1427 + $0xe8] sm:$0xf]
    %v1487 = vld [vmem:[%s1427 + $0xec] sm:$0xf]
    %v1488 = vld [vmem:[%s1427 + $0xf0] sm:$0xf]
    %v1489 = vld [vmem:[%s1427 + $0xf4] sm:$0xf]
    %v1490 = vld [vmem:[%s1427 + $0xf8] sm:$0xf]
    %v1491 = vld [vmem:[%s1427 + $0xfc] sm:$0xf]
    %v1493 = vshrl.u32 %v1426, 16
    %v1495 = vrot.slane %v1493, 2
    %v1496 = vshll.u32 %v1426, 16
    %v1498 = vrot.slane %v1496, 3
    %v1499 = vor.u32 %v1495, %v1498
    %v1500 = vsel %vm244, %v1499, %v1499
    %v1566 = vunpack.c.l.b16 %v1428
    %v1567 = vunpack.c.l.b16 %v1429
    %v1568 = vunpack.c.l.b16 %v1430
    %v1569 = vunpack.c.l.b16 %v1431
    %v1570 = vunpack.c.l.b16 %v1432
    %v1571 = vunpack.c.l.b16 %v1433
    %v1572 = vunpack.c.l.b16 %v1434
    %v1573 = vunpack.c.l.b16 %v1435
    %v1574 = vunpack.c.l.b16 %v1436
    %v1575 = vunpack.c.l.b16 %v1437
    %v1576 = vunpack.c.l.b16 %v1438
    %v1577 = vunpack.c.l.b16 %v1439
    %v1578 = vunpack.c.l.b16 %v1440
    %v1579 = vunpack.c.l.b16 %v1441
    %v1580 = vunpack.c.l.b16 %v1442
    %v1581 = vunpack.c.l.b16 %v1443
    %v1582 = vunpack.c.l.b16 %v1444
    %v1583 = vunpack.c.l.b16 %v1445
    %v1584 = vunpack.c.l.b16 %v1446
    %v1585 = vunpack.c.l.b16 %v1447
    %v1586 = vunpack.c.l.b16 %v1448
    %v1587 = vunpack.c.l.b16 %v1449
    %v1588 = vunpack.c.l.b16 %v1450
    %v1589 = vunpack.c.l.b16 %v1451
    %v1590 = vunpack.c.l.b16 %v1452
    %v1591 = vunpack.c.l.b16 %v1453
    %v1592 = vunpack.c.l.b16 %v1454
    %v1593 = vunpack.c.l.b16 %v1455
    %v1594 = vunpack.c.l.b16 %v1456
    %v1595 = vunpack.c.l.b16 %v1457
    %v1596 = vunpack.c.l.b16 %v1458
    %v1597 = vunpack.c.l.b16 %v1459
    %v1598 = vunpack.c.l.b16 %v1460
    %v1599 = vunpack.c.l.b16 %v1461
    %v1600 = vunpack.c.l.b16 %v1462
    %v1601 = vunpack.c.l.b16 %v1463
    %v1602 = vunpack.c.l.b16 %v1464
    %v1603 = vunpack.c.l.b16 %v1465
    %v1604 = vunpack.c.l.b16 %v1466
    %v1605 = vunpack.c.l.b16 %v1467
    %v1606 = vunpack.c.l.b16 %v1468
    %v1607 = vunpack.c.l.b16 %v1469
    %v1608 = vunpack.c.l.b16 %v1470
    %v1609 = vunpack.c.l.b16 %v1471
    %v1610 = vunpack.c.l.b16 %v1472
    %v1611 = vunpack.c.l.b16 %v1473
    %v1612 = vunpack.c.l.b16 %v1474
    %v1613 = vunpack.c.l.b16 %v1475
    %v1614 = vunpack.c.l.b16 %v1476
    %v1615 = vunpack.c.l.b16 %v1477
    %v1616 = vunpack.c.l.b16 %v1478
    %v1617 = vunpack.c.l.b16 %v1479
    %v1618 = vunpack.c.l.b16 %v1480
    %v1619 = vunpack.c.l.b16 %v1481
    %v1620 = vunpack.c.l.b16 %v1482
    %v1621 = vunpack.c.l.b16 %v1483
    %v1622 = vunpack.c.l.b16 %v1484
    %v1623 = vunpack.c.l.b16 %v1485
    %v1624 = vunpack.c.l.b16 %v1486
    %v1625 = vunpack.c.l.b16 %v1487
    %v1626 = vunpack.c.l.b16 %v1488
    %v1627 = vunpack.c.l.b16 %v1489
    %v1628 = vunpack.c.l.b16 %v1490
    %v1629 = vunpack.c.l.b16 %v1491
    %v1630 = vpack.c.b16 %v1567, %v1566
    %v1631 = vpack.c.b16 %v1569, %v1568
    %v1632 = vpack.c.b16 %v1571, %v1570
    %v1633 = vpack.c.b16 %v1573, %v1572
    %v1634 = vpack.c.b16 %v1575, %v1574
    %v1635 = vpack.c.b16 %v1577, %v1576
    %v1636 = vpack.c.b16 %v1579, %v1578
    %v1637 = vpack.c.b16 %v1581, %v1580
    %v1638 = vpack.c.b16 %v1583, %v1582
    %v1639 = vpack.c.b16 %v1585, %v1584
    %v1640 = vpack.c.b16 %v1587, %v1586
    %v1641 = vpack.c.b16 %v1589, %v1588
    %v1642 = vpack.c.b16 %v1591, %v1590
    %v1643 = vpack.c.b16 %v1593, %v1592
    %v1644 = vpack.c.b16 %v1595, %v1594
    %v1645 = vpack.c.b16 %v1597, %v1596
    %v1646 = vpack.c.b16 %v1599, %v1598
    %v1647 = vpack.c.b16 %v1601, %v1600
    %v1648 = vpack.c.b16 %v1603, %v1602
    %v1649 = vpack.c.b16 %v1605, %v1604
    %v1650 = vpack.c.b16 %v1607, %v1606
    %v1651 = vpack.c.b16 %v1609, %v1608
    %v1652 = vpack.c.b16 %v1611, %v1610
    %v1653 = vpack.c.b16 %v1613, %v1612
    %v1654 = vpack.c.b16 %v1615, %v1614
    %v1655 = vpack.c.b16 %v1617, %v1616
    %v1656 = vpack.c.b16 %v1619, %v1618
    %v1657 = vpack.c.b16 %v1621, %v1620
    %v1658 = vpack.c.b16 %v1623, %v1622
    %v1659 = vpack.c.b16 %v1625, %v1624
    %v1660 = vpack.c.b16 %v1627, %v1626
    %v1661 = vpack.c.b16 %v1629, %v1628
    %1694 = vmatprep.subr.bf16.mxu0 0
    %1695 = vmatpush1.bf16.msra.mxu0 %v1637
    %1696 = vmatprep.subr.bf16.mxu0 0
    %1697 = vmatpush1.bf16.msra.mxu0 %v1636
    %1698 = vmatprep.subr.bf16.mxu0 0
    %1699 = vmatpush1.bf16.msra.mxu0 %v1635
    %1700 = vmatprep.subr.bf16.mxu0 0
    %1701 = vmatpush1.bf16.msra.mxu0 %v1634
    %1702 = vmatprep.subr.bf16.mxu0 0
    %1703 = vmatpush1.bf16.msra.mxu0 %v1633
    %1704 = vmatprep.subr.bf16.mxu0 0
    %1705 = vmatpush1.bf16.msra.mxu0 %v1632
    %1706 = vmatprep.subr.bf16.mxu0 0
    %1707 = vmatpush1.bf16.msra.mxu0 %v1631
    %1708 = vmatprep.subr.bf16.mxu0 0
    %1709 = vmatpush1.bf16.msra.mxu0 %v1630
    %1710 = vmatprep.subr.bf16.mxu0 0
    %1711 = vmatpush2.bf16.msra.mxu0 %v1645
    %1712 = vmatprep.subr.bf16.mxu0 0
    %1713 = vmatpush2.bf16.msra.mxu0 %v1644
    %1714 = vmatprep.subr.bf16.mxu0 0
    %1715 = vmatpush2.bf16.msra.mxu0 %v1643
    %1716 = vmatprep.subr.bf16.mxu0 0
    %1717 = vmatpush2.bf16.msra.mxu0 %v1642
    %1718 = vmatprep.subr.bf16.mxu0 0
    %1719 = vmatpush2.bf16.msra.mxu0 %v1641
    %1720 = vmatprep.subr.bf16.mxu0 0
    %1721 = vmatpush2.bf16.msra.mxu0 %v1640
    %1722 = vmatprep.subr.bf16.mxu0 0
    %1723 = vmatpush2.bf16.msra.mxu0 %v1639
    %1724 = vmatprep.subr.bf16.mxu0 0
    %1725 = vmatpush2.bf16.msra.mxu0 %v1638
    %1726 = vmatprep.mubr.bf16.mxu0 %v705
    %1727 = vmatmul.mubr.bf16.gmra.mxu0 %v251
    %v1728 = vpop.f32.mrf.mxu0
    %v1729 = vadd.f32 0.0, %v1728
    %v1730 = vpop.f32.mrf.mxu0
    %v1731 = vpop.f32.mrf.mxu0
    %v1732 = vadd.f32 0.0, %v1731
    %v1733 = vpop.f32.mrf.mxu0
    %1734 = vdwg.mxu0
    %1735 = vmatprep.subr.bf16.mxu0 0
    %1736 = vmatpush1.bf16.msra.mxu0 %v1653
    %1737 = vmatprep.subr.bf16.mxu0 0
    %1738 = vmatpush1.bf16.msra.mxu0 %v1652
    %1739 = vmatprep.subr.bf16.mxu0 0
    %1740 = vmatpush1.bf16.msra.mxu0 %v1651
    %1741 = vmatprep.subr.bf16.mxu0 0
    %1742 = vmatpush1.bf16.msra.mxu0 %v1650
    %1743 = vmatprep.subr.bf16.mxu0 0
    %1744 = vmatpush1.bf16.msra.mxu0 %v1649
    %1745 = vmatprep.subr.bf16.mxu0 0
    %1746 = vmatpush1.bf16.msra.mxu0 %v1648
    %1747 = vmatprep.subr.bf16.mxu0 0
    %1748 = vmatpush1.bf16.msra.mxu0 %v1647
    %1749 = vmatprep.subr.bf16.mxu0 0
    %1750 = vmatpush1.bf16.msra.mxu0 %v1646
    %1751 = vmatprep.subr.bf16.mxu0 0
    %1752 = vmatpush2.bf16.msra.mxu0 %v1661
    %1753 = vmatprep.subr.bf16.mxu0 0
    %1754 = vmatpush2.bf16.msra.mxu0 %v1660
    %1755 = vmatprep.subr.bf16.mxu0 0
    %1756 = vmatpush2.bf16.msra.mxu0 %v1659
    %1757 = vmatprep.subr.bf16.mxu0 0
    %1758 = vmatpush2.bf16.msra.mxu0 %v1658
    %1759 = vmatprep.subr.bf16.mxu0 0
    %1760 = vmatpush2.bf16.msra.mxu0 %v1657
    %1761 = vmatprep.subr.bf16.mxu0 0
    %1762 = vmatpush2.bf16.msra.mxu0 %v1656
    %1763 = vmatprep.subr.bf16.mxu0 0
    %1764 = vmatpush2.bf16.msra.mxu0 %v1655
    %1765 = vmatprep.subr.bf16.mxu0 0
    %1766 = vmatpush2.bf16.msra.mxu0 %v1654
    %1767 = vmatprep.mubr.bf16.mxu0 %v1500
    %1768 = vmatmul.mubr.bf16.gmra.mxu0 %v1110
    %v1769 = vpop.f32.mrf.mxu0
    %v1770 = vadd.f32 %v1729, %v1769
    %v1771 = vpop.f32.mrf.mxu0
    %v1772 = vpop.f32.mrf.mxu0
    %v1773 = vadd.f32 %v1732, %v1772
    %v1774 = vpop.f32.mrf.mxu0
    %1775 = vdwg.mxu0
    %v1776 = vmul.f32 %v1770, %v121
    %v1777 = vmul.f32 %v1773, %v122
    %v1778 = vsel %vm575, %v1777, 0.0
    %v1779 = vadd.f32 %v1776, %v1778
    %v1780 = vrot.slane %v1779, 4
    %v1781 = vadd.f32 %v1779, %v1780
    %v1782 = vrot.slane %v1781, 2
    %v1783 = vadd.f32 %v1781, %v1782
    %v1784 = vrot.slane %v1783, 1
    %v1785 = vadd.f32 %v1783, %v1784
    %v1786 = vadd.f32 %v1414, %v1785
    %v1787 = vmul.f32 %v1776, %v1770
    %v1788 = vmul.f32 %v1777, %v1773
    %v1789 = vsel %vm575, %v1788, 0.0
    %v1790 = vadd.f32 %v1787, %v1789
    %v1791 = vrot.slane %v1790, 4
    %v1792 = vadd.f32 %v1790, %v1791
    %v1793 = vrot.slane %v1792, 2
    %v1794 = vadd.f32 %v1792, %v1793
    %v1795 = vrot.slane %v1794, 1
    %v1796 = vadd.f32 %v1794, %v1795
    %v1797 = vadd.f32 %v1425, %v1796
    %v1798 = vmul.f32 %v1786, 0.125
    %v1799 = vmul.f32 %v1797, 0.125
    %v1800 = vmul.f32 %v1798, %v1798
    %v1801 = vsub.f32 %v1799, %v1800
    %v1802 = vmax.f32 %v1801, 0.0
    %v1803 = vld [vmem:[%s2] sm:$0x1]
    %v1804 = vadd.f32 %v1802, 1e-05
    %v1805 = vrsqrt.pop %v1804
    %v1806 = vmul.f32 %v1803, %v1805
    %v1807 = vld [vmem:[%s3] sm:$0x1]
    %v1808 = vmul.f32 %v1798, %v1806
    %v1809 = vsub.f32 %v1807, %v1808
    %v1811 = vlaneseq
    %v1812 = vshrl.u32 %v1811, 7
    %v1813 = vsub.s32 0, %v1812
    %v1814 = vrot.slane %v1806, %v1813
    %v1816 = vmul.f32 %v567, %v1814
    %v1817 = vmul.f32 %v570, %v1814
    %v1819 = vlaneseq
    %v1820 = vshrl.u32 %v1819, 7
    %v1821 = vsub.s32 0, %v1820
    %v1822 = vrot.slane %v1809, %v1821
    %v1824 = vadd.f32 %v1816, %v1822
    %v1825 = vadd.f32 %v1817, %v1822
    %v1826 = vmax.f32 %v1824, 0.0
    %v1827 = vmax.f32 %v1825, 0.0
    %v1828 = vpack.c.bf16 %v1827, %v1826
    %vm1829 = vcmask 1041408
    %vm1830 = vmand %vm1829, %vm160
    %v1831 = vld [vmem:[%s4] sm:$0x3]
    %v1832 = vsel %vm1830, %v1828, %v1831
    %1833 = vst [vmem:[%s4] sm:$0x3] %v1832
    %v1835 = vcombine.high %v1828, %v1828
    %v1837 = vunpack.c.l.s4 1983009808
    %v1838 = vunpack.c.0.s8 %v1837
    %v1839 = vlaneseq
    %v1840 = vshrl.u32 %v1839, 7
    %v1841 = vsub.s32 %v1838, %v1840
    %v1842 = vrot.slane %v1835, %v1841
    %v1843 = vcombine.high %v1842, %v1842
    %s1845 = scalar_lea.vmem %s4, 2
    %v1846 = vld [vmem:[%s1845] sm:$0x3]
    %v1847 = vsel %vm1830, %v1843, %v1846
    %1848 = vst [vmem:[%s1845] sm:$0x3] %v1847
    %v1849 = vmul.f32 %v993, %v1814
    %v1850 = vmul.f32 %v996, %v1814
    %v1851 = vadd.f32 %v1849, %v1822
    %v1852 = vadd.f32 %v1850, %v1822
    %v1853 = vmax.f32 %v1851, 0.0
    %v1854 = vmax.f32 %v1852, 0.0
    %v1855 = vpack.c.bf16 %v1854, %v1853
    %s1856 = scalar_lea.vmem %s4, 4
    %v1857 = vld [vmem:[%s1856] sm:$0x3]
    %v1858 = vsel %vm1830, %v1855, %v1857
    %1859 = vst [vmem:[%s1856] sm:$0x3] %v1858
    %v1861 = vcombine.high %v1855, %v1855
    %v1863 = vunpack.c.l.s4 1983009808
    %v1864 = vunpack.c.0.s8 %v1863
    %v1865 = vlaneseq
    %v1866 = vshrl.u32 %v1865, 7
    %v1867 = vsub.s32 %v1864, %v1866
    %v1868 = vrot.slane %v1861, %v1867
    %v1869 = vcombine.high %v1868, %v1868
    %s1871 = scalar_lea.vmem %s4, 6
    %v1872 = vld [vmem:[%s1871] sm:$0x3]
    %v1873 = vsel %vm1830, %v1869, %v1872
    %1874 = vst [vmem:[%s1871] sm:$0x3] %v1873
    %v1875 = vmul.f32 %v1398, %v1814
    %v1876 = vmul.f32 %v1401, %v1814
    %v1877 = vadd.f32 %v1875, %v1822
    %v1878 = vadd.f32 %v1876, %v1822
    %v1879 = vmax.f32 %v1877, 0.0
    %v1880 = vmax.f32 %v1878, 0.0
    %v1881 = vpack.c.bf16 %v1880, %v1879
    %s1882 = scalar_lea.vmem %s4, 8
    %v1883 = vld [vmem:[%s1882] sm:$0x3]
    %v1884 = vsel %vm1830, %v1881, %v1883
    %1885 = vst [vmem:[%s1882] sm:$0x3] %v1884
    %v1887 = vcombine.high %v1881, %v1881
    %v1889 = vunpack.c.l.s4 1983009808
    %v1890 = vunpack.c.0.s8 %v1889
    %v1891 = vlaneseq
    %v1892 = vshrl.u32 %v1891, 7
    %v1893 = vsub.s32 %v1890, %v1892
    %v1894 = vrot.slane %v1887, %v1893
    %v1895 = vcombine.high %v1894, %v1894
    %s1897 = scalar_lea.vmem %s4, 10
    %v1898 = vld [vmem:[%s1897] sm:$0x3]
    %v1899 = vsel %vm1830, %v1895, %v1898
    %1900 = vst [vmem:[%s1897] sm:$0x3] %v1899
    %v1901 = vmul.f32 %v1770, %v1814
    %v1902 = vmul.f32 %v1773, %v1814
    %v1903 = vadd.f32 %v1901, %v1822
    %v1904 = vadd.f32 %v1902, %v1822
    %v1905 = vmax.f32 %v1903, 0.0
    %v1906 = vmax.f32 %v1904, 0.0
    %v1907 = vpack.c.bf16 %v1906, %v1905
    %s1908 = scalar_lea.vmem %s4, 12
    %v1909 = vld [vmem:[%s1908] sm:$0x3]
    %v1910 = vsel %vm1830, %v1907, %v1909
    %1911 = vst [vmem:[%s1908] sm:$0x3] %v1910
    %v1913 = vcombine.high %v1907, %v1907
    %v1915 = vunpack.c.l.s4 1983009808
    %v1916 = vunpack.c.0.s8 %v1915
    %v1917 = vlaneseq
    %v1918 = vshrl.u32 %v1917, 7
    %v1919 = vsub.s32 %v1916, %v1918
    %v1920 = vrot.slane %v1913, %v1919
    %v1921 = vcombine.high %v1920, %v1920
    %s1923 = scalar_lea.vmem %s4, 14
    %v1924 = vld [vmem:[%s1923] sm:$0x3]
    %v1925 = vsel %vm1830, %v1921, %v1924
    %1926 = vst [vmem:[%s1923] sm:$0x3] %v1925
    // Predicated region
    $region26: #{tpu_custom_call.1} parent=1 // pred_check
      _
    $region27: #{tpu_custom_call.1} parent=1 // pred_check_branch
      %1928 = sbr.rel (0) target = $region29
    $region28: #{tpu_custom_call.1} parent=1 // pred_region
      _
    $region29: #{tpu_custom_call.1} parent=1 // pred_fallthru
      _
    // Predicated region
    $region30: #{tpu_custom_call.1} parent=1 // pred_check
      _
    $region31: #{tpu_custom_call.1} parent=1 // pred_check_branch
      %1930 = sbr.rel (0) target = $region33
    $region32: #{tpu_custom_call.1} parent=1 // pred_region
      _
    $region33: #{tpu_custom_call.1} parent=1 // pred_fallthru
      _
    %1931 = vsyncpa [#allocation3], 1
    %1932 = vsyncpa [#allocation5], 1

</llo_original>
